<compile_context>
chip_gen: v6e
topology: v6e:2x2x1
jax: 0.10.0
libtpu: 0.0.40
codegen_flags: <defaults>
</compile_context>

<pallas_src>
import jax
import jax.numpy as jnp
from jax.experimental import pallas as pl
from jax.experimental.pallas import tpu as pltpu


def biaffine_kernel(head_ref, dep_ref, w_r_aug_ref, w2_row_ref, e_rep_ref,
                    g_ref, gt_ref, out_ref):
    TB, S, H1 = head_ref.shape
    H2 = dep_ref.shape[-1]
    L = g_ref.shape[-1]
    LH2 = L * H2
    M = TB * S

    head_f = head_ref[...].reshape(M, H1)   # leading-dim merge (free, S % 8 == 0)
    dep_f = dep_ref[...].reshape(M, H2)

    # --- bilinear + linear score, all on the MXU --------------------------
    # One MXU pass for the head side: columns [0:LH2) = packed bilinear W,
    # columns [LH2:LH2+L) = head part of the linear layer (W1^T).
    t_full = jnp.dot(head_f, w_r_aug_ref[...],
                     preferred_element_type=jnp.float32)       # [M, LH2+L]
    # dep part of the linear layer folded as a broadcast row add: after the
    # elementwise multiply with dep_rep and the block-sum with G this becomes
    # sum_j w_lin[k, H1+j] * dep[:, j].
    t = t_full[:, :LH2] + w2_row_ref[...]                      # [M, LH2]
    lin_head = t_full[:, LH2:]                                 # [M, L]

    # Lane replication of dep on the (otherwise idle) MXU instead of a
    # lane-offset concatenate: dep_rep[:, k*H2+j] = dep[:, j].
    dep_rep = jnp.dot(dep_f, e_rep_ref[...],
                      preferred_element_type=jnp.float32)      # [M, LH2]

    bil = jnp.dot(t * dep_rep, g_ref[...],
                  preferred_element_type=jnp.float32)          # [M, L]
    # bilinear bias omitted: constant along the softmax (seq) axis -> no-op.
    score = (bil + lin_head).reshape(TB, S, L)                 # leading split (free)

    # --- softmax over the seq axis (per batch element, per label) ---------
    # TODO(synk): for production S (>=128), transpose score to [TB, L, S] so
    # exp/max/sum run lane-dense, and use a batched MXU einsum
    # ('bls,bsh->blh') epilogue instead of the VPU/XLU path below.
    m = jnp.max(score, axis=1, keepdims=True)                  # [TB, 1, L]
    e = jnp.exp(score - m)                                     # [TB, S, L]
    denom = jnp.sum(e, axis=1, keepdims=True)                  # [TB, 1, L]
    att = e / denom                                            # exact divide

    # --- attention output written directly as a lane-dense [TB, LH2] slab:
    #     out[b, k*H2+j] = sum_s att[b,s,k] * dep[b,s,j]
    att_rep = jnp.dot(att.reshape(M, L), gt_ref[...],
                      preferred_element_type=jnp.float32)      # [M, LH2]
    out_ref[...] = jnp.sum(
        att_rep.reshape(TB, S, LH2) * dep_rep.reshape(TB, S, LH2),  # reuse dep_rep
        axis=1).astype(out_ref.dtype)


def _pick_tb(B, S, *, m_cap=1024):
    """Batch elements per grid step.  Blocks stay sublane-friendly (8 | TB or
    TB == B).  Prefer the largest M = TB*S <= m_cap (single-TC v5e/v6e
    amortise the ~0.35us/step overhead and fill the MXU rows); keep >=2 grid
    steps (v7x megacore) only when each step still has M >= 256."""
    cands = [d for d in range(1, B + 1)
             if B % d == 0 and (d == B or d % 8 == 0) and d * S <= m_cap]
    if not cands:
        return B
    multi = [d for d in cands if B // d >= 2 and d * S >= 256]
    return max(multi) if multi else max(cands)


def _vmem_limit_bytes(tb, S, H1, H2, L):
    """Explicit scoped-VMEM request from the actual block sizes
    (double-buffered I/O blocks + resident packed weights + temp headroom)."""
    f32 = 4
    lh2 = L * H2
    io = 2 * (tb * S * H1 + tb * S * H2 + tb * lh2) * f32
    w = 2 * (H1 * (lh2 + L) + lh2 + H2 * lh2 + lh2 * L + L * lh2) * f32
    tmp = 6 * tb * S * lh2 * f32
    return int(min(100 * 2 ** 20, max(32 * 2 ** 20, 2 * (io + w + tmp))))


def biaffine_attention(head, dep, w_bil, bias, w_lin, *, tb=None):
    """head, dep: [B,S,H]; w_bil: [L,H1,H2]; bias: [L]; w_lin: [L, H1+H2]."""
    B, S, H1 = head.shape
    H2 = dep.shape[-1]
    L = w_bil.shape[0]
    del bias  # constant along the softmax (seq) axis -> no effect on output

    # TODO(synk): pad S to a multiple of 8 (and mask padded rows before the
    # softmax) when production S is not 8-aligned; the free-reshape claims in
    # the kernel rely on S % 8 == 0.
    assert S % 8 == 0, "seq_len must be a multiple of 8 (pad + mask upstream)"

    if tb is None:
        tb = _pick_tb(B, S)
    assert B % tb == 0

    dt = head.dtype
    lh2 = L * H2

    # Host-side weight packing (layout plumbing, not compute):
    #   w_r[i, k*H2+j] = w_bil[k, i, j];  w_r_aug = [w_r | W1^T]
    w_r = jnp.transpose(w_bil, (1, 0, 2)).reshape(H1, lh2)
    w_r_aug = jnp.concatenate(
        [w_r, jnp.transpose(w_lin[:, :H1])], axis=1).astype(dt)   # [H1, lh2+L]
    w2_row = w_lin[:, H1:].reshape(1, lh2).astype(dt)             # [1, lh2]
    e_rep = jnp.tile(jnp.eye(H2, dtype=dt), (1, L))                # [H2, lh2]
    g = jnp.repeat(jnp.eye(L, dtype=dt), H2, axis=0)               # [lh2, L]
    gt = jnp.transpose(g)                                          # [L, lh2]

    # TODO(synk): for large L*H1*H2 (v7x: 64 MiB VMEM), tile the packed
    # bilinear weight over an extra label-chunk grid axis and single-buffer
    # the constant-index weight specs (pipeline_mode=pl.Buffered(1)).
    # TODO(synk): for production sizes, feed bf16 operands to the MXU
    # (keep softmax math in f32) to halve HBM/VMEM traffic.

    out_flat = pl.pallas_call(
        biaffine_kernel,
        out_shape=jax.ShapeDtypeStruct((B, lh2), dt),
        grid_spec=pltpu.PrefetchScalarGridSpec(
            num_scalar_prefetch=0,
            grid=(B // tb,),
            in_specs=[
                pl.BlockSpec((tb, S, H1), lambda b: (b, 0, 0)),   # head
                pl.BlockSpec((tb, S, H2), lambda b: (b, 0, 0)),   # dep
                pl.BlockSpec((H1, lh2 + L), lambda b: (0, 0)),    # [bilinear | W1.T]
                pl.BlockSpec((1, lh2), lambda b: (0, 0)),         # dep-linear row
                pl.BlockSpec((H2, lh2), lambda b: (0, 0)),        # lane replicator E
                pl.BlockSpec((lh2, L), lambda b: (0, 0)),         # block-sum selector G
                pl.BlockSpec((L, lh2), lambda b: (0, 0)),         # G.T
            ],
            out_specs=pl.BlockSpec((tb, lh2), lambda b: (b, 0)),
        ),
        compiler_params=pltpu.CompilerParams(
            dimension_semantics=("parallel",),
            vmem_limit_bytes=_vmem_limit_bytes(tb, S, H1, H2, L)),
    )(head, dep, w_r_aug, w2_row, e_rep, g, gt)

    return out_flat.reshape(B, L, H2)


def reference(head, dep, w_bil, bias, w_lin):
    bil = jnp.einsum('bsi,kij,bsj->bsk', head, w_bil, dep) + bias
    cat = jnp.concatenate([head, dep], axis=-1)
    lin = cat @ w_lin.T
    score = jnp.swapaxes(bil + lin, 1, 2)          # [B, L, S]
    att = jax.nn.softmax(score, axis=-1)
    return jnp.einsum('bls,bsh->blh', att, dep)    # [B, L, H2]


if __name__ == "__main__":
    B, S = 16, 16
    IN1, IN2, NUM_LABEL = 32, 32, 4        # L*IN2 = 128 -> lane-dense output

    key = jax.random.PRNGKey(0)
    k_head, k_dep, k_wb, k_bb, k_wl = jax.random.split(key, 5)

    head = jax.random.normal(k_head, (B, S, IN1), jnp.float32)
    dep = jax.random.normal(k_dep, (B, S, IN2), jnp.float32)

    # Deterministic parameter init (shapes match nn.Bilinear / nn.Linear).
    w_bil = 0.1 * jax.random.normal(k_wb, (NUM_LABEL, IN1, IN2), jnp.float32)
    bias = 0.1 * jax.random.normal(k_bb, (NUM_LABEL,), jnp.float32)
    w_lin = 0.1 * jax.random.normal(k_wl, (NUM_LABEL, IN1 + IN2), jnp.float32)

    out = biaffine_attention(head, dep, w_bil, bias, w_lin)
    out = jax.block_until_ready(out)

    ref = reference(head, dep, w_bil, bias, w_lin)
    assert out.shape == (B, NUM_LABEL, IN2)
    err = float(jnp.max(jnp.abs(out - ref)))
    assert jnp.allclose(out, ref, atol=1e-3, rtol=1e-3), err

    print("KERNEL_OK")
</pallas_src>

<mosaic_0001>
module attributes {stable_mosaic.version = 11 : i64} {
  func.func @biaffine_kernel(%arg0: i32, %arg1: memref<16x16x32xf32, #tpu.memory_space<vmem>>, %arg2: memref<16x16x32xf32, #tpu.memory_space<vmem>>, %arg3: memref<32x132xf32, #tpu.memory_space<vmem>>, %arg4: memref<1x128xf32, #tpu.memory_space<vmem>>, %arg5: memref<32x128xf32, #tpu.memory_space<vmem>>, %arg6: memref<128x4xf32, #tpu.memory_space<vmem>>, %arg7: memref<4x128xf32, #tpu.memory_space<vmem>>, %arg8: memref<16x128xf32, #tpu.memory_space<vmem>>) attributes {dimension_semantics = [#tpu.dimension_semantics<parallel>], iteration_bounds = array<i64: 1>, scalar_prefetch = 0 : i64, scratch_operands = 0 : i64, tpu.core_type = #tpu.core_type<tc>, window_params = [{transform_indices = @transform_0, window_bounds = array<i64: 16, 16, 32>}, {transform_indices = @transform_1, window_bounds = array<i64: 16, 16, 32>}, {pipeline_mode = #tpu.pipeline_mode<synchronous>, transform_indices = @transform_2, window_bounds = array<i64: 32, 132>}, {pipeline_mode = #tpu.pipeline_mode<synchronous>, transform_indices = @transform_3, window_bounds = array<i64: 1, 128>}, {pipeline_mode = #tpu.pipeline_mode<synchronous>, transform_indices = @transform_4, window_bounds = array<i64: 32, 128>}, {pipeline_mode = #tpu.pipeline_mode<synchronous>, transform_indices = @transform_5, window_bounds = array<i64: 128, 4>}, {pipeline_mode = #tpu.pipeline_mode<synchronous>, transform_indices = @transform_6, window_bounds = array<i64: 4, 128>}, {transform_indices = @transform_7, window_bounds = array<i64: 16, 128>}]} {
    %c0 = arith.constant 0 : index
    %c0_0 = arith.constant 0 : index
    %c0_1 = arith.constant 0 : index
    %0 = vector.load %arg1[%c0, %c0_0, %c0_1] : memref<16x16x32xf32, #tpu.memory_space<vmem>>, vector<16x16x32xf32>
    %1 = vector.shape_cast %0 : vector<16x16x32xf32> to vector<256x32xf32>
    %c0_2 = arith.constant 0 : index
    %c0_3 = arith.constant 0 : index
    %c0_4 = arith.constant 0 : index
    %2 = vector.load %arg2[%c0_2, %c0_3, %c0_4] : memref<16x16x32xf32, #tpu.memory_space<vmem>>, vector<16x16x32xf32>
    %3 = vector.shape_cast %2 : vector<16x16x32xf32> to vector<256x32xf32>
    %c0_5 = arith.constant 0 : index
    %c0_6 = arith.constant 0 : index
    %4 = vector.load %arg3[%c0_5, %c0_6] : memref<32x132xf32, #tpu.memory_space<vmem>>, vector<32x132xf32>
    %cst = arith.constant dense<0.000000e+00> : vector<256x132xf32>
    %5 = tpu.matmul %1, %4, %cst {dimension_numbers = #tpu.dot_dimension_numbers<[1], [0], [0], [1], [0, 0, 1, 1], [], []>} : vector<256x32xf32>, vector<32x132xf32>, vector<256x132xf32> -> vector<256x132xf32>
    %6 = vector.extract_strided_slice %5 {offsets = [0, 0], sizes = [256, 128], strides = [1, 1]} : vector<256x132xf32> to vector<256x128xf32>
    %c0_7 = arith.constant 0 : index
    %c0_8 = arith.constant 0 : index
    %7 = vector.load %arg4[%c0_7, %c0_8] : memref<1x128xf32, #tpu.memory_space<vmem>>, vector<1x128xf32>
    %8 = vector.broadcast %7 : vector<1x128xf32> to vector<256x128xf32>
    %9 = arith.addf %6, %8 : vector<256x128xf32>
    %10 = vector.extract_strided_slice %5 {offsets = [0, 128], sizes = [256, 4], strides = [1, 1]} : vector<256x132xf32> to vector<256x4xf32>
    %c0_9 = arith.constant 0 : index
    %c0_10 = arith.constant 0 : index
    %11 = vector.load %arg5[%c0_9, %c0_10] : memref<32x128xf32, #tpu.memory_space<vmem>>, vector<32x128xf32>
    %cst_11 = arith.constant dense<0.000000e+00> : vector<256x128xf32>
    %12 = tpu.matmul %3, %11, %cst_11 {dimension_numbers = #tpu.dot_dimension_numbers<[1], [0], [0], [1], [0, 0, 1, 1], [], []>} : vector<256x32xf32>, vector<32x128xf32>, vector<256x128xf32> -> vector<256x128xf32>
    %13 = arith.mulf %9, %12 : vector<256x128xf32>
    %c0_12 = arith.constant 0 : index
    %c0_13 = arith.constant 0 : index
    %14 = vector.load %arg6[%c0_12, %c0_13] : memref<128x4xf32, #tpu.memory_space<vmem>>, vector<128x4xf32>
    %cst_14 = arith.constant dense<0.000000e+00> : vector<256x4xf32>
    %15 = tpu.matmul %13, %14, %cst_14 {dimension_numbers = #tpu.dot_dimension_numbers<[1], [0], [0], [1], [0, 0, 1, 1], [], []>} : vector<256x128xf32>, vector<128x4xf32>, vector<256x4xf32> -> vector<256x4xf32>
    %16 = arith.addf %15, %10 : vector<256x4xf32>
    %17 = vector.shape_cast %16 : vector<256x4xf32> to vector<16x16x4xf32>
    %cst_15 = arith.constant dense<0xFF800000> : vector<16x4xf32>
    %18 = vector.multi_reduction <maximumf>, %17, %cst_15 [1] : vector<16x16x4xf32> to vector<16x4xf32>
    %19 = vector.shape_cast %18 : vector<16x4xf32> to vector<16x1x4xf32>
    %20 = vector.broadcast %19 : vector<16x1x4xf32> to vector<16x16x4xf32>
    %21 = arith.subf %17, %20 : vector<16x16x4xf32>
    %22 = math.exp %21 : vector<16x16x4xf32>
    %cst_16 = arith.constant dense<0.000000e+00> : vector<16x4xf32>
    %23 = vector.multi_reduction <add>, %22, %cst_16 [1] : vector<16x16x4xf32> to vector<16x4xf32>
    %24 = vector.shape_cast %23 : vector<16x4xf32> to vector<16x1x4xf32>
    %25 = vector.broadcast %24 : vector<16x1x4xf32> to vector<16x16x4xf32>
    %26 = arith.divf %22, %25 : vector<16x16x4xf32>
    %27 = vector.shape_cast %26 : vector<16x16x4xf32> to vector<256x4xf32>
    %c0_17 = arith.constant 0 : index
    %c0_18 = arith.constant 0 : index
    %28 = vector.load %arg7[%c0_17, %c0_18] : memref<4x128xf32, #tpu.memory_space<vmem>>, vector<4x128xf32>
    %cst_19 = arith.constant dense<0.000000e+00> : vector<256x128xf32>
    %29 = tpu.matmul %27, %28, %cst_19 {dimension_numbers = #tpu.dot_dimension_numbers<[1], [0], [0], [1], [0, 0, 1, 1], [], []>} : vector<256x4xf32>, vector<4x128xf32>, vector<256x128xf32> -> vector<256x128xf32>
    %30 = vector.shape_cast %29 : vector<256x128xf32> to vector<16x16x128xf32>
    %31 = vector.shape_cast %12 : vector<256x128xf32> to vector<16x16x128xf32>
    %32 = arith.mulf %30, %31 : vector<16x16x128xf32>
    %cst_20 = arith.constant dense<0.000000e+00> : vector<16x128xf32>
    %33 = vector.multi_reduction <add>, %32, %cst_20 [1] : vector<16x16x128xf32> to vector<16x128xf32>
    %c0_21 = arith.constant 0 : index
    %c0_22 = arith.constant 0 : index
    %34 = vector.load %arg8[%c0_21, %c0_22] : memref<16x128xf32, #tpu.memory_space<vmem>>, vector<16x128xf32>
    tpu.vector_store %arg8[%c0_21, %c0_22], %33 {strides = array<i32>} : memref<16x128xf32, #tpu.memory_space<vmem>>, vector<16x128xf32>,
    return
  }
  func.func @transform_0(%arg0: i32) -> (i32, i32, i32) {
    %c0_i32 = arith.constant 0 : i32
    %c0_i32_0 = arith.constant 0 : i32
    %c0_i32_1 = arith.constant 0 : i32
    return %arg0, %c0_i32, %c0_i32_0 : i32, i32, i32
  }
  func.func @transform_1(%arg0: i32) -> (i32, i32, i32) {
    %c0_i32 = arith.constant 0 : i32
    %c0_i32_0 = arith.constant 0 : i32
    %c0_i32_1 = arith.constant 0 : i32
    return %arg0, %c0_i32, %c0_i32_0 : i32, i32, i32
  }
  func.func @transform_2(%arg0: i32) -> (i32, i32) {
    %c0_i32 = arith.constant 0 : i32
    %c0_i32_0 = arith.constant 0 : i32
    %c0_i32_1 = arith.constant 0 : i32
    return %c0_i32, %c0_i32_0 : i32, i32
  }
  func.func @transform_3(%arg0: i32) -> (i32, i32) {
    %c0_i32 = arith.constant 0 : i32
    %c0_i32_0 = arith.constant 0 : i32
    %c0_i32_1 = arith.constant 0 : i32
    return %c0_i32, %c0_i32_0 : i32, i32
  }
  func.func @transform_4(%arg0: i32) -> (i32, i32) {
    %c0_i32 = arith.constant 0 : i32
    %c0_i32_0 = arith.constant 0 : i32
    %c0_i32_1 = arith.constant 0 : i32
    return %c0_i32, %c0_i32_0 : i32, i32
  }
  func.func @transform_5(%arg0: i32) -> (i32, i32) {
    %c0_i32 = arith.constant 0 : i32
    %c0_i32_0 = arith.constant 0 : i32
    %c0_i32_1 = arith.constant 0 : i32
    return %c0_i32, %c0_i32_0 : i32, i32
  }
  func.func @transform_6(%arg0: i32) -> (i32, i32) {
    %c0_i32 = arith.constant 0 : i32
    %c0_i32_0 = arith.constant 0 : i32
    %c0_i32_1 = arith.constant 0 : i32
    return %c0_i32, %c0_i32_0 : i32, i32
  }
  func.func @transform_7(%arg0: i32) -> (i32, i32) {
    %c0_i32 = arith.constant 0 : i32
    %c0_i32_0 = arith.constant 0 : i32
    return %arg0, %c0_i32 : i32, i32
  }
}

</mosaic_0001>

<llo_original>
// kernel: tpu_custom_call.1
$region0: #{tpu_custom_call.1}
  #allocation0 [shape = 'u32[]', space=smem, size = 0x4, offset = 0x4, fixed_abs, tag = 'smem constant byte address 0x4 - core index']
  #allocation1 [shape = 'u32[144,128]{1,0:T(1,128)}', space=vmem, size = 0x12000, scoped, tag = 'internal scratch']
  %s0 = inlined_call_operand.hbm [shape: f32[16,16,32], index: 0, kind: input, shape index: {}]
  %s1 = inlined_call_operand.hbm [shape: f32[16,16,32], index: 1, kind: input, shape index: {}]
  %s2 = inlined_call_operand.vmem [shape: f32[32,132], index: 2, kind: input, shape index: {}]
  %s3 = inlined_call_operand.vmem [shape: f32[1,128], index: 3, kind: input, shape index: {}]
  %s4 = inlined_call_operand.vmem [shape: f32[32,128], index: 4, kind: input, shape index: {}]
  %s5 = inlined_call_operand.vmem [shape: f32[128,4], index: 5, kind: input, shape index: {}]
  %s6 = inlined_call_operand.vmem [shape: f32[4,128], index: 6, kind: input, shape index: {}]
  %s7 = inlined_call_operand.hbm [shape: f32[16,128], index: 7, kind: output, shape index: {}]
  %s8 = sld [smem:[#allocation0]]
  $region46: #{tpu_custom_call.1} parent=0
    _
  %s10 = ssub.s32 1, %s8
  %s11 = scalar_select 0, %s10, %s8
  $region1: #{tpu_custom_call.1} parent=0
    #allocation2 [shape = 'u8[131072]{0}', space=vmem, size = 0x20000, scoped, tag = 'input window, operand 0, single buffered']
    #allocation3 [shape = 's32[1]{0}', space=sflag, size = 0x4, scoped, tag = 'scoped memory for tpu_custom_call.1']
    #allocation4 [shape = 's32[1]{0}', space=sflag, size = 0x4, scoped, tag = 'scoped memory for tpu_custom_call.1']
    #allocation5 [shape = 'u8[131072]{0}', space=vmem, size = 0x20000, scoped, tag = 'input window, operand 1, single buffered']
    #allocation6 [shape = 's32[1]{0}', space=sflag, size = 0x4, scoped, tag = 'scoped memory for tpu_custom_call.1']
    #allocation7 [shape = 'u8[8192]{0}', space=vmem, size = 0x2000, scoped, tag = 'output window, operand 0, single buffered']
    %12 = vsyncpa [#allocation3], 0
    %13 = vsyncpa [#allocation6], 0
    %14 = vsyncpa [#allocation4], 0
    // Predicated region
    $region2: #{tpu_custom_call.1} parent=1 // pred_check
      _
    $region3: #{tpu_custom_call.1} parent=1 // pred_check_branch
      %16 = sbr.rel (0) target = $region5
    $region4: #{tpu_custom_call.1} parent=1 // pred_region
      %s18 = ssub.s32 4096, 4096
      %19 = vsyncadd [#allocation3], %s18
      %s20 = sshll.u32 [#allocation2], 4
      %s21 = int_to_ptr.vmem [resolvable:$true] %s20
      %26 = dma.hbm_to_vmem [thread:$0]  %s0, 4096, %s21, [#allocation3], 128, 128, 8
    $region5: #{tpu_custom_call.1} parent=1 // pred_fallthru
      _
    // Predicated region
    $region6: #{tpu_custom_call.1} parent=1 // pred_check
      _
    $region7: #{tpu_custom_call.1} parent=1 // pred_check_branch
      %28 = sbr.rel (0) target = $region9
    $region8: #{tpu_custom_call.1} parent=1 // pred_region
      %s30 = ssub.s32 4096, 4096
      %31 = vsyncadd [#allocation6], %s30
      %s32 = sshll.u32 [#allocation5], 4
      %s33 = int_to_ptr.vmem [resolvable:$true] %s32
      %38 = dma.hbm_to_vmem [thread:$0]  %s1, 4096, %s33, [#allocation6], 128, 128, 8
    $region9: #{tpu_custom_call.1} parent=1 // pred_fallthru
      _
    // Predicated region
    $region10: #{tpu_custom_call.1} parent=1 // pred_check
      _
    $region11: #{tpu_custom_call.1} parent=1 // pred_check_branch
      %40 = sbr.rel (0) target = $region13
    $region12: #{tpu_custom_call.1} parent=1 // pred_region
      _
    $region13: #{tpu_custom_call.1} parent=1 // pred_fallthru
      _
    // Predicated region
    $region14: #{tpu_custom_call.1} parent=1 // pred_check
      _
    $region15: #{tpu_custom_call.1} parent=1 // pred_check_branch
      %42 = sbr.rel (0) target = $region17
    $region16: #{tpu_custom_call.1} parent=1 // pred_region
      _
    $region17: #{tpu_custom_call.1} parent=1 // pred_fallthru
      _
    // Predicated region
    $region18: #{tpu_custom_call.1} parent=1 // pred_check
      _
    $region19: #{tpu_custom_call.1} parent=1 // pred_check_branch
      %44 = sbr.rel (0) target = $region21
    $region20: #{tpu_custom_call.1} parent=1 // pred_region
      _
    $region21: #{tpu_custom_call.1} parent=1 // pred_fallthru
      _
    // Predicated region
    $region22: #{tpu_custom_call.1} parent=1 // pred_check
      _
    $region23: #{tpu_custom_call.1} parent=1 // pred_check_branch
      %46 = sbr.rel (0) target = $region25
    $region24: #{tpu_custom_call.1} parent=1 // pred_region
      _
    $region25: #{tpu_custom_call.1} parent=1 // pred_fallthru
      _
    // Predicated region
    $region26: #{tpu_custom_call.1} parent=1 // pred_check
      _
    $region27: #{tpu_custom_call.1} parent=1 // pred_check_branch
      %48 = sbr.rel (0) target = $region29
    $region28: #{tpu_custom_call.1} parent=1 // pred_region
      _
    $region29: #{tpu_custom_call.1} parent=1 // pred_fallthru
      _
    // Predicated region
    $region30: #{tpu_custom_call.1} parent=1 // pred_check
      _
    $region31: #{tpu_custom_call.1} parent=1 // pred_check_branch
      %50 = sbr.rel (0) target = $region33
    $region32: #{tpu_custom_call.1} parent=1 // pred_region
      %51 = dma.done [#allocation3], 4096
    $region33: #{tpu_custom_call.1} parent=1 // pred_fallthru
      _
    // Predicated region
    $region34: #{tpu_custom_call.1} parent=1 // pred_check
      _
    $region35: #{tpu_custom_call.1} parent=1 // pred_check_branch
      %53 = sbr.rel (0) target = $region37
    $region36: #{tpu_custom_call.1} parent=1 // pred_region
      %54 = dma.done [#allocation6], 4096
    $region37: #{tpu_custom_call.1} parent=1 // pred_fallthru
      _
    %v55 = vld [vmem:[#allocation2] sm:$0xff]
    %v56 = vld [vmem:[#allocation2 + $0x8] sm:$0xff]
    %v57 = vld [vmem:[#allocation2 + $0x10] sm:$0xff]
    %v58 = vld [vmem:[#allocation2 + $0x18] sm:$0xff]
    %v59 = vld [vmem:[#allocation2 + $0x20] sm:$0xff]
    %v60 = vld [vmem:[#allocation2 + $0x28] sm:$0xff]
    %v61 = vld [vmem:[#allocation2 + $0x30] sm:$0xff]
    %v62 = vld [vmem:[#allocation2 + $0x38] sm:$0xff]
    %v63 = vld [vmem:[#allocation2 + $0x40] sm:$0xff]
    %v64 = vld [vmem:[#allocation2 + $0x48] sm:$0xff]
    %v65 = vld [vmem:[#allocation2 + $0x50] sm:$0xff]
    %v66 = vld [vmem:[#allocation2 + $0x58] sm:$0xff]
    %v67 = vld [vmem:[#allocation2 + $0x60] sm:$0xff]
    %v68 = vld [vmem:[#allocation2 + $0x68] sm:$0xff]
    %v69 = vld [vmem:[#allocation2 + $0x70] sm:$0xff]
    %v70 = vld [vmem:[#allocation2 + $0x78] sm:$0xff]
    %v71 = vld [vmem:[#allocation2 + $0x80] sm:$0xff]
    %v72 = vld [vmem:[#allocation2 + $0x88] sm:$0xff]
    %v73 = vld [vmem:[#allocation2 + $0x90] sm:$0xff]
    %v74 = vld [vmem:[#allocation2 + $0x98] sm:$0xff]
    %v75 = vld [vmem:[#allocation2 + $0xa0] sm:$0xff]
    %v76 = vld [vmem:[#allocation2 + $0xa8] sm:$0xff]
    %v77 = vld [vmem:[#allocation2 + $0xb0] sm:$0xff]
    %v78 = vld [vmem:[#allocation2 + $0xb8] sm:$0xff]
    %v79 = vld [vmem:[#allocation2 + $0xc0] sm:$0xff]
    %v80 = vld [vmem:[#allocation2 + $0xc8] sm:$0xff]
    %v81 = vld [vmem:[#allocation2 + $0xd0] sm:$0xff]
    %v82 = vld [vmem:[#allocation2 + $0xd8] sm:$0xff]
    %v83 = vld [vmem:[#allocation2 + $0xe0] sm:$0xff]
    %v84 = vld [vmem:[#allocation2 + $0xe8] sm:$0xff]
    %v85 = vld [vmem:[#allocation2 + $0xf0] sm:$0xff]
    %v86 = vld [vmem:[#allocation2 + $0xf8] sm:$0xff]
    %v87 = vld [vmem:[#allocation5] sm:$0xff]
    %v88 = vld [vmem:[#allocation5 + $0x8] sm:$0xff]
    %v89 = vld [vmem:[#allocation5 + $0x10] sm:$0xff]
    %v90 = vld [vmem:[#allocation5 + $0x18] sm:$0xff]
    %v91 = vld [vmem:[#allocation5 + $0x20] sm:$0xff]
    %v92 = vld [vmem:[#allocation5 + $0x28] sm:$0xff]
    %v93 = vld [vmem:[#allocation5 + $0x30] sm:$0xff]
    %v94 = vld [vmem:[#allocation5 + $0x38] sm:$0xff]
    %v95 = vld [vmem:[#allocation5 + $0x40] sm:$0xff]
    %v96 = vld [vmem:[#allocation5 + $0x48] sm:$0xff]
    %v97 = vld [vmem:[#allocation5 + $0x50] sm:$0xff]
    %v98 = vld [vmem:[#allocation5 + $0x58] sm:$0xff]
    %v99 = vld [vmem:[#allocation5 + $0x60] sm:$0xff]
    %v100 = vld [vmem:[#allocation5 + $0x68] sm:$0xff]
    %v101 = vld [vmem:[#allocation5 + $0x70] sm:$0xff]
    %v102 = vld [vmem:[#allocation5 + $0x78] sm:$0xff]
    %v103 = vld [vmem:[#allocation5 + $0x80] sm:$0xff]
    %v104 = vld [vmem:[#allocation5 + $0x88] sm:$0xff]
    %v105 = vld [vmem:[#allocation5 + $0x90] sm:$0xff]
    %v106 = vld [vmem:[#allocation5 + $0x98] sm:$0xff]
    %v107 = vld [vmem:[#allocation5 + $0xa0] sm:$0xff]
    %v108 = vld [vmem:[#allocation5 + $0xa8] sm:$0xff]
    %v109 = vld [vmem:[#allocation5 + $0xb0] sm:$0xff]
    %v110 = vld [vmem:[#allocation5 + $0xb8] sm:$0xff]
    %v111 = vld [vmem:[#allocation5 + $0xc0] sm:$0xff]
    %v112 = vld [vmem:[#allocation5 + $0xc8] sm:$0xff]
    %v113 = vld [vmem:[#allocation5 + $0xd0] sm:$0xff]
    %v114 = vld [vmem:[#allocation5 + $0xd8] sm:$0xff]
    %v115 = vld [vmem:[#allocation5 + $0xe0] sm:$0xff]
    %v116 = vld [vmem:[#allocation5 + $0xe8] sm:$0xff]
    %v117 = vld [vmem:[#allocation5 + $0xf0] sm:$0xff]
    %v118 = vld [vmem:[#allocation5 + $0xf8] sm:$0xff]
    %v119 = vld [vmem:[%s2] sm:$0xff]
    %v120 = vld [vmem:[%s2 + $0x8] sm:$0xff]
    %v121 = vld [vmem:[%s2 + $0x10] sm:$0xff]
    %v122 = vld [vmem:[%s2 + $0x18] sm:$0xff]
    %v123 = vld [vmem:[%s2 + $0x20] sm:$0xff]
    %v124 = vld [vmem:[%s2 + $0x28] sm:$0xff]
    %v125 = vld [vmem:[%s2 + $0x30] sm:$0xff]
    %v126 = vld [vmem:[%s2 + $0x38] sm:$0xff]
    %vm127 = vcmask 261120
    %v129 = vsel %vm127, %v55, 0
    %v132 = vsel %vm127, %v56, 0
    %v135 = vsel %vm127, %v57, 0
    %v138 = vsel %vm127, %v58, 0
    %v141 = vsel %vm127, %v59, 0
    %v144 = vsel %vm127, %v60, 0
    %v147 = vsel %vm127, %v61, 0
    %v150 = vsel %vm127, %v62, 0
    %v153 = vsel %vm127, %v63, 0
    %v156 = vsel %vm127, %v64, 0
    %v159 = vsel %vm127, %v65, 0
    %v162 = vsel %vm127, %v66, 0
    %v165 = vsel %vm127, %v67, 0
    %v168 = vsel %vm127, %v68, 0
    %v171 = vsel %vm127, %v69, 0
    %v174 = vsel %vm127, %v70, 0
    %v177 = vsel %vm127, %v71, 0
    %v180 = vsel %vm127, %v72, 0
    %v183 = vsel %vm127, %v73, 0
    %v186 = vsel %vm127, %v74, 0
    %v189 = vsel %vm127, %v75, 0
    %v192 = vsel %vm127, %v76, 0
    %v195 = vsel %vm127, %v77, 0
    %v198 = vsel %vm127, %v78, 0
    %v201 = vsel %vm127, %v79, 0
    %v204 = vsel %vm127, %v80, 0
    %v207 = vsel %vm127, %v81, 0
    %v210 = vsel %vm127, %v82, 0
    %v213 = vsel %vm127, %v83, 0
    %v216 = vsel %vm127, %v84, 0
    %v219 = vsel %vm127, %v85, 0
    %v222 = vsel %vm127, %v86, 0
    %224 = vmatprep.subr.mxu0 0.0
    %225 = vmatpush1.msra.mxu0 0.0
    %226 = vmatprep.subr.mxu0 0.0
    %227 = vmatpush1.msra.mxu0 0.0
    %228 = vmatprep.subr.mxu0 0.0
    %229 = vmatpush1.msra.mxu0 0.0
    %230 = vmatprep.subr.mxu0 0.0
    %231 = vmatpush1.msra.mxu0 0.0
    %232 = vmatprep.subr.mxu0 0.0
    %233 = vmatpush1.msra.mxu0 0.0
    %234 = vmatprep.subr.mxu0 0.0
    %235 = vmatpush1.msra.mxu0 0.0
    %236 = vmatprep.subr.mxu0 0.0
    %237 = vmatpush1.msra.mxu0 0.0
    %238 = vmatprep.subr.mxu0 0.0
    %239 = vmatpush1.msra.mxu0 0.0
    %240 = vmatprep.subr.mxu0 0.0
    %241 = vmatpush1.msra.mxu0 0.0
    %242 = vmatprep.subr.mxu0 0.0
    %243 = vmatpush1.msra.mxu0 0.0
    %244 = vmatprep.subr.mxu0 0.0
    %245 = vmatpush1.msra.mxu0 0.0
    %246 = vmatprep.subr.mxu0 0.0
    %247 = vmatpush1.msra.mxu0 0.0
    %248 = vmatprep.subr.mxu0 %v126
    %249 = vmatpush1.msra.mxu0 %v125
    %250 = vmatprep.subr.mxu0 %v124
    %251 = vmatpush1.msra.mxu0 %v123
    %252 = vmatprep.subr.mxu0 %v122
    %253 = vmatpush1.msra.mxu0 %v121
    %254 = vmatprep.subr.mxu0 %v120
    %255 = vmatpush1.msra.mxu0 %v119
    %256 = vmatprep.subr.mxu0 0.0
    %257 = vmatpush2.msra.mxu0 0.0
    %258 = vmatprep.subr.mxu0 0.0
    %259 = vmatpush2.msra.mxu0 0.0
    %260 = vmatprep.subr.mxu0 0.0
    %261 = vmatpush2.msra.mxu0 0.0
    %262 = vmatprep.subr.mxu0 0.0
    %263 = vmatpush2.msra.mxu0 0.0
    %264 = vmatprep.subr.mxu0 0.0
    %265 = vmatpush2.msra.mxu0 0.0
    %266 = vmatprep.subr.mxu0 0.0
    %267 = vmatpush2.msra.mxu0 0.0
    %268 = vmatprep.subr.mxu0 0.0
    %269 = vmatpush2.msra.mxu0 0.0
    %270 = vmatprep.subr.mxu0 0.0
    %271 = vmatpush2.msra.mxu0 0.0
    %272 = vmatprep.subr.mxu0 0.0
    %273 = vmatpush2.msra.mxu0 0.0
    %274 = vmatprep.subr.mxu0 0.0
    %275 = vmatpush2.msra.mxu0 0.0
    %276 = vmatprep.subr.mxu0 0.0
    %277 = vmatpush2.msra.mxu0 0.0
    %278 = vmatprep.subr.mxu0 0.0
    %279 = vmatpush2.msra.mxu0 0.0
    %280 = vmatprep.subr.mxu0 0.0
    %281 = vmatpush2.msra.mxu0 0.0
    %282 = vmatprep.subr.mxu0 0.0
    %283 = vmatpush2.msra.mxu0 0.0
    %284 = vmatprep.subr.mxu0 0.0
    %285 = vmatpush2.msra.mxu0 0.0
    %286 = vmatprep.subr.mxu0 0.0
    %287 = vmatpush2.msra.mxu0 0.0
    %288 = vmatprep.mubr.f32.mxu0 0.0
    %289 = vmatmul.mubr.f32.gmra.mxu0 %v129
    %v290 = vpop.f32.mrf.mxu0
    %v291 = vadd.f32 0.0, %v290
    %v292 = vpop.f32.mrf.mxu0
    %v293 = vadd.f32 0.0, %v292
    %294 = vmatprep.mubr.f32.mxu0 0.0
    %295 = vmatmul.mubr.f32.gmra.mxu0 %v132
    %v296 = vpop.f32.mrf.mxu0
    %v297 = vadd.f32 0.0, %v296
    %v298 = vpop.f32.mrf.mxu0
    %v299 = vadd.f32 0.0, %v298
    %300 = vmatprep.mubr.f32.mxu0 0.0
    %301 = vmatmul.mubr.f32.gmra.mxu0 %v135
    %v302 = vpop.f32.mrf.mxu0
    %v303 = vadd.f32 0.0, %v302
    %v304 = vpop.f32.mrf.mxu0
    %v305 = vadd.f32 0.0, %v304
    %306 = vmatprep.mubr.f32.mxu0 0.0
    %307 = vmatmul.mubr.f32.gmra.mxu0 %v138
    %v308 = vpop.f32.mrf.mxu0
    %v309 = vadd.f32 0.0, %v308
    %v310 = vpop.f32.mrf.mxu0
    %v311 = vadd.f32 0.0, %v310
    %312 = vmatprep.mubr.f32.mxu0 0.0
    %313 = vmatmul.mubr.f32.gmra.mxu0 %v141
    %v314 = vpop.f32.mrf.mxu0
    %v315 = vadd.f32 0.0, %v314
    %v316 = vpop.f32.mrf.mxu0
    %v317 = vadd.f32 0.0, %v316
    %318 = vmatprep.mubr.f32.mxu0 0.0
    %319 = vmatmul.mubr.f32.gmra.mxu0 %v144
    %v320 = vpop.f32.mrf.mxu0
    %v321 = vadd.f32 0.0, %v320
    %v322 = vpop.f32.mrf.mxu0
    %v323 = vadd.f32 0.0, %v322
    %324 = vmatprep.mubr.f32.mxu0 0.0
    %325 = vmatmul.mubr.f32.gmra.mxu0 %v147
    %v326 = vpop.f32.mrf.mxu0
    %v327 = vadd.f32 0.0, %v326
    %v328 = vpop.f32.mrf.mxu0
    %v329 = vadd.f32 0.0, %v328
    %330 = vmatprep.mubr.f32.mxu0 0.0
    %331 = vmatmul.mubr.f32.gmra.mxu0 %v150
    %v332 = vpop.f32.mrf.mxu0
    %v333 = vadd.f32 0.0, %v332
    %v334 = vpop.f32.mrf.mxu0
    %v335 = vadd.f32 0.0, %v334
    %336 = vmatprep.mubr.f32.mxu0 0.0
    %337 = vmatmul.mubr.f32.gmra.mxu0 %v153
    %v338 = vpop.f32.mrf.mxu0
    %v339 = vadd.f32 0.0, %v338
    %v340 = vpop.f32.mrf.mxu0
    %v341 = vadd.f32 0.0, %v340
    %342 = vmatprep.mubr.f32.mxu0 0.0
    %343 = vmatmul.mubr.f32.gmra.mxu0 %v156
    %v344 = vpop.f32.mrf.mxu0
    %v345 = vadd.f32 0.0, %v344
    %v346 = vpop.f32.mrf.mxu0
    %v347 = vadd.f32 0.0, %v346
    %348 = vmatprep.mubr.f32.mxu0 0.0
    %349 = vmatmul.mubr.f32.gmra.mxu0 %v159
    %v350 = vpop.f32.mrf.mxu0
    %v351 = vadd.f32 0.0, %v350
    %v352 = vpop.f32.mrf.mxu0
    %v353 = vadd.f32 0.0, %v352
    %354 = vmatprep.mubr.f32.mxu0 0.0
    %355 = vmatmul.mubr.f32.gmra.mxu0 %v162
    %v356 = vpop.f32.mrf.mxu0
    %v357 = vadd.f32 0.0, %v356
    %v358 = vpop.f32.mrf.mxu0
    %v359 = vadd.f32 0.0, %v358
    %360 = vmatprep.mubr.f32.mxu0 0.0
    %361 = vmatmul.mubr.f32.gmra.mxu0 %v165
    %v362 = vpop.f32.mrf.mxu0
    %v363 = vadd.f32 0.0, %v362
    %v364 = vpop.f32.mrf.mxu0
    %v365 = vadd.f32 0.0, %v364
    %366 = vmatprep.mubr.f32.mxu0 0.0
    %367 = vmatmul.mubr.f32.gmra.mxu0 %v168
    %v368 = vpop.f32.mrf.mxu0
    %v369 = vadd.f32 0.0, %v368
    %v370 = vpop.f32.mrf.mxu0
    %v371 = vadd.f32 0.0, %v370
    %372 = vmatprep.mubr.f32.mxu0 0.0
    %373 = vmatmul.mubr.f32.gmra.mxu0 %v171
    %v374 = vpop.f32.mrf.mxu0
    %v375 = vadd.f32 0.0, %v374
    %v376 = vpop.f32.mrf.mxu0
    %v377 = vadd.f32 0.0, %v376
    %378 = vmatprep.mubr.f32.mxu0 0.0
    %379 = vmatmul.mubr.f32.gmra.mxu0 %v174
    %v380 = vpop.f32.mrf.mxu0
    %v381 = vadd.f32 0.0, %v380
    %v382 = vpop.f32.mrf.mxu0
    %v383 = vadd.f32 0.0, %v382
    %384 = vmatprep.mubr.f32.mxu0 0.0
    %385 = vmatmul.mubr.f32.gmra.mxu0 %v177
    %v386 = vpop.f32.mrf.mxu0
    %v387 = vadd.f32 0.0, %v386
    %v388 = vpop.f32.mrf.mxu0
    %v389 = vadd.f32 0.0, %v388
    %390 = vmatprep.mubr.f32.mxu0 0.0
    %391 = vmatmul.mubr.f32.gmra.mxu0 %v180
    %v392 = vpop.f32.mrf.mxu0
    %v393 = vadd.f32 0.0, %v392
    %v394 = vpop.f32.mrf.mxu0
    %v395 = vadd.f32 0.0, %v394
    %396 = vmatprep.mubr.f32.mxu0 0.0
    %397 = vmatmul.mubr.f32.gmra.mxu0 %v183
    %v398 = vpop.f32.mrf.mxu0
    %v399 = vadd.f32 0.0, %v398
    %v400 = vpop.f32.mrf.mxu0
    %v401 = vadd.f32 0.0, %v400
    %402 = vmatprep.mubr.f32.mxu0 0.0
    %403 = vmatmul.mubr.f32.gmra.mxu0 %v186
    %v404 = vpop.f32.mrf.mxu0
    %v405 = vadd.f32 0.0, %v404
    %v406 = vpop.f32.mrf.mxu0
    %v407 = vadd.f32 0.0, %v406
    %408 = vmatprep.mubr.f32.mxu0 0.0
    %409 = vmatmul.mubr.f32.gmra.mxu0 %v189
    %v410 = vpop.f32.mrf.mxu0
    %v411 = vadd.f32 0.0, %v410
    %v412 = vpop.f32.mrf.mxu0
    %v413 = vadd.f32 0.0, %v412
    %414 = vmatprep.mubr.f32.mxu0 0.0
    %415 = vmatmul.mubr.f32.gmra.mxu0 %v192
    %v416 = vpop.f32.mrf.mxu0
    %v417 = vadd.f32 0.0, %v416
    %v418 = vpop.f32.mrf.mxu0
    %v419 = vadd.f32 0.0, %v418
    %420 = vmatprep.mubr.f32.mxu0 0.0
    %421 = vmatmul.mubr.f32.gmra.mxu0 %v195
    %v422 = vpop.f32.mrf.mxu0
    %v423 = vadd.f32 0.0, %v422
    %v424 = vpop.f32.mrf.mxu0
    %v425 = vadd.f32 0.0, %v424
    %426 = vmatprep.mubr.f32.mxu0 0.0
    %427 = vmatmul.mubr.f32.gmra.mxu0 %v198
    %v428 = vpop.f32.mrf.mxu0
    %v429 = vadd.f32 0.0, %v428
    %v430 = vpop.f32.mrf.mxu0
    %v431 = vadd.f32 0.0, %v430
    %432 = vmatprep.mubr.f32.mxu0 0.0
    %433 = vmatmul.mubr.f32.gmra.mxu0 %v201
    %v434 = vpop.f32.mrf.mxu0
    %v435 = vadd.f32 0.0, %v434
    %v436 = vpop.f32.mrf.mxu0
    %v437 = vadd.f32 0.0, %v436
    %438 = vmatprep.mubr.f32.mxu0 0.0
    %439 = vmatmul.mubr.f32.gmra.mxu0 %v204
    %v440 = vpop.f32.mrf.mxu0
    %v441 = vadd.f32 0.0, %v440
    %v442 = vpop.f32.mrf.mxu0
    %v443 = vadd.f32 0.0, %v442
    %444 = vmatprep.mubr.f32.mxu0 0.0
    %445 = vmatmul.mubr.f32.gmra.mxu0 %v207
    %v446 = vpop.f32.mrf.mxu0
    %v447 = vadd.f32 0.0, %v446
    %v448 = vpop.f32.mrf.mxu0
    %v449 = vadd.f32 0.0, %v448
    %450 = vmatprep.mubr.f32.mxu0 0.0
    %451 = vmatmul.mubr.f32.gmra.mxu0 %v210
    %v452 = vpop.f32.mrf.mxu0
    %v453 = vadd.f32 0.0, %v452
    %v454 = vpop.f32.mrf.mxu0
    %v455 = vadd.f32 0.0, %v454
    %456 = vmatprep.mubr.f32.mxu0 0.0
    %457 = vmatmul.mubr.f32.gmra.mxu0 %v213
    %v458 = vpop.f32.mrf.mxu0
    %v459 = vadd.f32 0.0, %v458
    %v460 = vpop.f32.mrf.mxu0
    %v461 = vadd.f32 0.0, %v460
    %462 = vmatprep.mubr.f32.mxu0 0.0
    %463 = vmatmul.mubr.f32.gmra.mxu0 %v216
    %v464 = vpop.f32.mrf.mxu0
    %v465 = vadd.f32 0.0, %v464
    %v466 = vpop.f32.mrf.mxu0
    %v467 = vadd.f32 0.0, %v466
    %468 = vmatprep.mubr.f32.mxu0 0.0
    %469 = vmatmul.mubr.f32.gmra.mxu0 %v219
    %v470 = vpop.f32.mrf.mxu0
    %v471 = vadd.f32 0.0, %v470
    %v472 = vpop.f32.mrf.mxu0
    %v473 = vadd.f32 0.0, %v472
    %474 = vmatprep.mubr.f32.mxu0 0.0
    %475 = vmatmul.mubr.f32.gmra.mxu0 %v222
    %v476 = vpop.f32.mrf.mxu0
    %v477 = vadd.f32 0.0, %v476
    %v478 = vpop.f32.mrf.mxu0
    %v479 = vadd.f32 0.0, %v478
    %480 = vdwg.mxu0
    %v481 = vld [vmem:[%s3] sm:$0x1]
    %v483 = vlaneseq
    %v484 = vshrl.u32 %v483, 7
    %v485 = vsub.s32 0, %v484
    %v486 = vrot.slane %v481, %v485
    %v488 = vadd.f32 %v291, %v486
    %v489 = vadd.f32 %v297, %v486
    %v490 = vadd.f32 %v303, %v486
    %v491 = vadd.f32 %v309, %v486
    %v492 = vadd.f32 %v315, %v486
    %v493 = vadd.f32 %v321, %v486
    %v494 = vadd.f32 %v327, %v486
    %v495 = vadd.f32 %v333, %v486
    %v496 = vadd.f32 %v339, %v486
    %v497 = vadd.f32 %v345, %v486
    %v498 = vadd.f32 %v351, %v486
    %v499 = vadd.f32 %v357, %v486
    %v500 = vadd.f32 %v363, %v486
    %v501 = vadd.f32 %v369, %v486
    %v502 = vadd.f32 %v375, %v486
    %v503 = vadd.f32 %v381, %v486
    %v504 = vadd.f32 %v387, %v486
    %v505 = vadd.f32 %v393, %v486
    %v506 = vadd.f32 %v399, %v486
    %v507 = vadd.f32 %v405, %v486
    %v508 = vadd.f32 %v411, %v486
    %v509 = vadd.f32 %v417, %v486
    %v510 = vadd.f32 %v423, %v486
    %v511 = vadd.f32 %v429, %v486
    %v512 = vadd.f32 %v435, %v486
    %v513 = vadd.f32 %v441, %v486
    %v514 = vadd.f32 %v447, %v486
    %v515 = vadd.f32 %v453, %v486
    %v516 = vadd.f32 %v459, %v486
    %v517 = vadd.f32 %v465, %v486
    %v518 = vadd.f32 %v471, %v486
    %v519 = vadd.f32 %v477, %v486
    %v520 = vld [vmem:[%s4] sm:$0xff]
    %v521 = vld [vmem:[%s4 + $0x8] sm:$0xff]
    %v522 = vld [vmem:[%s4 + $0x10] sm:$0xff]
    %v523 = vld [vmem:[%s4 + $0x18] sm:$0xff]
    %v525 = vsel %vm127, %v87, 0
    %v528 = vsel %vm127, %v88, 0
    %v531 = vsel %vm127, %v89, 0
    %v534 = vsel %vm127, %v90, 0
    %v537 = vsel %vm127, %v91, 0
    %v540 = vsel %vm127, %v92, 0
    %v543 = vsel %vm127, %v93, 0
    %v546 = vsel %vm127, %v94, 0
    %v549 = vsel %vm127, %v95, 0
    %v552 = vsel %vm127, %v96, 0
    %v555 = vsel %vm127, %v97, 0
    %v558 = vsel %vm127, %v98, 0
    %v561 = vsel %vm127, %v99, 0
    %v564 = vsel %vm127, %v100, 0
    %v567 = vsel %vm127, %v101, 0
    %v570 = vsel %vm127, %v102, 0
    %v573 = vsel %vm127, %v103, 0
    %v576 = vsel %vm127, %v104, 0
    %v579 = vsel %vm127, %v105, 0
    %v582 = vsel %vm127, %v106, 0
    %v585 = vsel %vm127, %v107, 0
    %v588 = vsel %vm127, %v108, 0
    %v591 = vsel %vm127, %v109, 0
    %v594 = vsel %vm127, %v110, 0
    %v597 = vsel %vm127, %v111, 0
    %v600 = vsel %vm127, %v112, 0
    %v603 = vsel %vm127, %v113, 0
    %v606 = vsel %vm127, %v114, 0
    %v609 = vsel %vm127, %v115, 0
    %v612 = vsel %vm127, %v116, 0
    %v615 = vsel %vm127, %v117, 0
    %v618 = vsel %vm127, %v118, 0
    %620 = vmatprep.subr.mxu0 0.0
    %621 = vmatpush1.msra.mxu0 0.0
    %622 = vmatprep.subr.mxu0 0.0
    %623 = vmatpush1.msra.mxu0 0.0
    %624 = vmatprep.subr.mxu0 0.0
    %625 = vmatpush1.msra.mxu0 0.0
    %626 = vmatprep.subr.mxu0 0.0
    %627 = vmatpush1.msra.mxu0 0.0
    %628 = vmatprep.subr.mxu0 0.0
    %629 = vmatpush1.msra.mxu0 0.0
    %630 = vmatprep.subr.mxu0 0.0
    %631 = vmatpush1.msra.mxu0 0.0
    %632 = vmatprep.subr.mxu0 0.0
    %633 = vmatpush1.msra.mxu0 0.0
    %634 = vmatprep.subr.mxu0 0.0
    %635 = vmatpush1.msra.mxu0 0.0
    %636 = vmatprep.subr.mxu0 0.0
    %637 = vmatpush1.msra.mxu0 0.0
    %638 = vmatprep.subr.mxu0 0.0
    %639 = vmatpush1.msra.mxu0 0.0
    %640 = vmatprep.subr.mxu0 0.0
    %641 = vmatpush1.msra.mxu0 0.0
    %642 = vmatprep.subr.mxu0 0.0
    %643 = vmatpush1.msra.mxu0 0.0
    %644 = vmatprep.subr.mxu0 0.0
    %645 = vmatpush1.msra.mxu0 %v523
    %646 = vmatprep.subr.mxu0 0.0
    %647 = vmatpush1.msra.mxu0 %v522
    %648 = vmatprep.subr.mxu0 0.0
    %649 = vmatpush1.msra.mxu0 %v521
    %650 = vmatprep.subr.mxu0 0.0
    %651 = vmatpush1.msra.mxu0 %v520
    %652 = vmatprep.subr.mxu0 0.0
    %653 = vmatpush2.msra.mxu0 0.0
    %654 = vmatprep.subr.mxu0 0.0
    %655 = vmatpush2.msra.mxu0 0.0
    %656 = vmatprep.subr.mxu0 0.0
    %657 = vmatpush2.msra.mxu0 0.0
    %658 = vmatprep.subr.mxu0 0.0
    %659 = vmatpush2.msra.mxu0 0.0
    %660 = vmatprep.subr.mxu0 0.0
    %661 = vmatpush2.msra.mxu0 0.0
    %662 = vmatprep.subr.mxu0 0.0
    %663 = vmatpush2.msra.mxu0 0.0
    %664 = vmatprep.subr.mxu0 0.0
    %665 = vmatpush2.msra.mxu0 0.0
    %666 = vmatprep.subr.mxu0 0.0
    %667 = vmatpush2.msra.mxu0 0.0
    %668 = vmatprep.subr.mxu0 0.0
    %669 = vmatpush2.msra.mxu0 0.0
    %670 = vmatprep.subr.mxu0 0.0
    %671 = vmatpush2.msra.mxu0 0.0
    %672 = vmatprep.subr.mxu0 0.0
    %673 = vmatpush2.msra.mxu0 0.0
    %674 = vmatprep.subr.mxu0 0.0
    %675 = vmatpush2.msra.mxu0 0.0
    %676 = vmatprep.subr.mxu0 0.0
    %677 = vmatpush2.msra.mxu0 0.0
    %678 = vmatprep.subr.mxu0 0.0
    %679 = vmatpush2.msra.mxu0 0.0
    %680 = vmatprep.subr.mxu0 0.0
    %681 = vmatpush2.msra.mxu0 0.0
    %682 = vmatprep.subr.mxu0 0.0
    %683 = vmatpush2.msra.mxu0 0.0
    %684 = vmatprep.mubr.f32.mxu0 0.0
    %685 = vmatmul.mubr.f32.gmra.mxu0 %v525
    %v686 = vpop.f32.mrf.mxu0
    %v687 = vadd.f32 0.0, %v686
    %v688 = vpop.f32.mrf.mxu0
    %689 = vmatprep.mubr.f32.mxu0 0.0
    %690 = vmatmul.mubr.f32.gmra.mxu0 %v528
    %v691 = vpop.f32.mrf.mxu0
    %v692 = vadd.f32 0.0, %v691
    %v693 = vpop.f32.mrf.mxu0
    %694 = vmatprep.mubr.f32.mxu0 0.0
    %695 = vmatmul.mubr.f32.gmra.mxu0 %v531
    %v696 = vpop.f32.mrf.mxu0
    %v697 = vadd.f32 0.0, %v696
    %v698 = vpop.f32.mrf.mxu0
    %699 = vmatprep.mubr.f32.mxu0 0.0
    %700 = vmatmul.mubr.f32.gmra.mxu0 %v534
    %v701 = vpop.f32.mrf.mxu0
    %v702 = vadd.f32 0.0, %v701
    %v703 = vpop.f32.mrf.mxu0
    %704 = vmatprep.mubr.f32.mxu0 0.0
    %705 = vmatmul.mubr.f32.gmra.mxu0 %v537
    %v706 = vpop.f32.mrf.mxu0
    %v707 = vadd.f32 0.0, %v706
    %v708 = vpop.f32.mrf.mxu0
    %709 = vmatprep.mubr.f32.mxu0 0.0
    %710 = vmatmul.mubr.f32.gmra.mxu0 %v540
    %v711 = vpop.f32.mrf.mxu0
    %v712 = vadd.f32 0.0, %v711
    %v713 = vpop.f32.mrf.mxu0
    %714 = vmatprep.mubr.f32.mxu0 0.0
    %715 = vmatmul.mubr.f32.gmra.mxu0 %v543
    %v716 = vpop.f32.mrf.mxu0
    %v717 = vadd.f32 0.0, %v716
    %v718 = vpop.f32.mrf.mxu0
    %719 = vmatprep.mubr.f32.mxu0 0.0
    %720 = vmatmul.mubr.f32.gmra.mxu0 %v546
    %v721 = vpop.f32.mrf.mxu0
    %v722 = vadd.f32 0.0, %v721
    %v723 = vpop.f32.mrf.mxu0
    %724 = vmatprep.mubr.f32.mxu0 0.0
    %725 = vmatmul.mubr.f32.gmra.mxu0 %v549
    %v726 = vpop.f32.mrf.mxu0
    %v727 = vadd.f32 0.0, %v726
    %v728 = vpop.f32.mrf.mxu0
    %729 = vmatprep.mubr.f32.mxu0 0.0
    %730 = vmatmul.mubr.f32.gmra.mxu0 %v552
    %v731 = vpop.f32.mrf.mxu0
    %v732 = vadd.f32 0.0, %v731
    %v733 = vpop.f32.mrf.mxu0
    %734 = vmatprep.mubr.f32.mxu0 0.0
    %735 = vmatmul.mubr.f32.gmra.mxu0 %v555
    %v736 = vpop.f32.mrf.mxu0
    %v737 = vadd.f32 0.0, %v736
    %v738 = vpop.f32.mrf.mxu0
    %739 = vmatprep.mubr.f32.mxu0 0.0
    %740 = vmatmul.mubr.f32.gmra.mxu0 %v558
    %v741 = vpop.f32.mrf.mxu0
    %v742 = vadd.f32 0.0, %v741
    %v743 = vpop.f32.mrf.mxu0
    %744 = vmatprep.mubr.f32.mxu0 0.0
    %745 = vmatmul.mubr.f32.gmra.mxu0 %v561
    %v746 = vpop.f32.mrf.mxu0
    %v747 = vadd.f32 0.0, %v746
    %v748 = vpop.f32.mrf.mxu0
    %749 = vmatprep.mubr.f32.mxu0 0.0
    %750 = vmatmul.mubr.f32.gmra.mxu0 %v564
    %v751 = vpop.f32.mrf.mxu0
    %v752 = vadd.f32 0.0, %v751
    %v753 = vpop.f32.mrf.mxu0
    %754 = vmatprep.mubr.f32.mxu0 0.0
    %755 = vmatmul.mubr.f32.gmra.mxu0 %v567
    %v756 = vpop.f32.mrf.mxu0
    %v757 = vadd.f32 0.0, %v756
    %v758 = vpop.f32.mrf.mxu0
    %759 = vmatprep.mubr.f32.mxu0 0.0
    %760 = vmatmul.mubr.f32.gmra.mxu0 %v570
    %v761 = vpop.f32.mrf.mxu0
    %v762 = vadd.f32 0.0, %v761
    %v763 = vpop.f32.mrf.mxu0
    %764 = vmatprep.mubr.f32.mxu0 0.0
    %765 = vmatmul.mubr.f32.gmra.mxu0 %v573
    %v766 = vpop.f32.mrf.mxu0
    %v767 = vadd.f32 0.0, %v766
    %v768 = vpop.f32.mrf.mxu0
    %769 = vmatprep.mubr.f32.mxu0 0.0
    %770 = vmatmul.mubr.f32.gmra.mxu0 %v576
    %v771 = vpop.f32.mrf.mxu0
    %v772 = vadd.f32 0.0, %v771
    %v773 = vpop.f32.mrf.mxu0
    %774 = vmatprep.mubr.f32.mxu0 0.0
    %775 = vmatmul.mubr.f32.gmra.mxu0 %v579
    %v776 = vpop.f32.mrf.mxu0
    %v777 = vadd.f32 0.0, %v776
    %v778 = vpop.f32.mrf.mxu0
    %779 = vmatprep.mubr.f32.mxu0 0.0
    %780 = vmatmul.mubr.f32.gmra.mxu0 %v582
    %v781 = vpop.f32.mrf.mxu0
    %v782 = vadd.f32 0.0, %v781
    %v783 = vpop.f32.mrf.mxu0
    %784 = vmatprep.mubr.f32.mxu0 0.0
    %785 = vmatmul.mubr.f32.gmra.mxu0 %v585
    %v786 = vpop.f32.mrf.mxu0
    %v787 = vadd.f32 0.0, %v786
    %v788 = vpop.f32.mrf.mxu0
    %789 = vmatprep.mubr.f32.mxu0 0.0
    %790 = vmatmul.mubr.f32.gmra.mxu0 %v588
    %v791 = vpop.f32.mrf.mxu0
    %v792 = vadd.f32 0.0, %v791
    %v793 = vpop.f32.mrf.mxu0
    %794 = vmatprep.mubr.f32.mxu0 0.0
    %795 = vmatmul.mubr.f32.gmra.mxu0 %v591
    %v796 = vpop.f32.mrf.mxu0
    %v797 = vadd.f32 0.0, %v796
    %v798 = vpop.f32.mrf.mxu0
    %799 = vmatprep.mubr.f32.mxu0 0.0
    %800 = vmatmul.mubr.f32.gmra.mxu0 %v594
    %v801 = vpop.f32.mrf.mxu0
    %v802 = vadd.f32 0.0, %v801
    %v803 = vpop.f32.mrf.mxu0
    %804 = vmatprep.mubr.f32.mxu0 0.0
    %805 = vmatmul.mubr.f32.gmra.mxu0 %v597
    %v806 = vpop.f32.mrf.mxu0
    %v807 = vadd.f32 0.0, %v806
    %v808 = vpop.f32.mrf.mxu0
    %809 = vmatprep.mubr.f32.mxu0 0.0
    %810 = vmatmul.mubr.f32.gmra.mxu0 %v600
    %v811 = vpop.f32.mrf.mxu0
    %v812 = vadd.f32 0.0, %v811
    %v813 = vpop.f32.mrf.mxu0
    %814 = vmatprep.mubr.f32.mxu0 0.0
    %815 = vmatmul.mubr.f32.gmra.mxu0 %v603
    %v816 = vpop.f32.mrf.mxu0
    %v817 = vadd.f32 0.0, %v816
    %v818 = vpop.f32.mrf.mxu0
    %819 = vmatprep.mubr.f32.mxu0 0.0
    %820 = vmatmul.mubr.f32.gmra.mxu0 %v606
    %v821 = vpop.f32.mrf.mxu0
    %v822 = vadd.f32 0.0, %v821
    %v823 = vpop.f32.mrf.mxu0
    %824 = vmatprep.mubr.f32.mxu0 0.0
    %825 = vmatmul.mubr.f32.gmra.mxu0 %v609
    %v826 = vpop.f32.mrf.mxu0
    %v827 = vadd.f32 0.0, %v826
    %v828 = vpop.f32.mrf.mxu0
    %829 = vmatprep.mubr.f32.mxu0 0.0
    %830 = vmatmul.mubr.f32.gmra.mxu0 %v612
    %v831 = vpop.f32.mrf.mxu0
    %v832 = vadd.f32 0.0, %v831
    %v833 = vpop.f32.mrf.mxu0
    %834 = vmatprep.mubr.f32.mxu0 0.0
    %835 = vmatmul.mubr.f32.gmra.mxu0 %v615
    %v836 = vpop.f32.mrf.mxu0
    %v837 = vadd.f32 0.0, %v836
    %v838 = vpop.f32.mrf.mxu0
    %839 = vmatprep.mubr.f32.mxu0 0.0
    %840 = vmatmul.mubr.f32.gmra.mxu0 %v618
    %v841 = vpop.f32.mrf.mxu0
    %v842 = vadd.f32 0.0, %v841
    %v843 = vpop.f32.mrf.mxu0
    %844 = vdwg.mxu0
    %v845 = vmul.f32 %v488, %v687
    %v846 = vmul.f32 %v489, %v692
    %v847 = vmul.f32 %v490, %v697
    %v848 = vmul.f32 %v491, %v702
    %v849 = vmul.f32 %v492, %v707
    %v850 = vmul.f32 %v493, %v712
    %v851 = vmul.f32 %v494, %v717
    %v852 = vmul.f32 %v495, %v722
    %v853 = vmul.f32 %v496, %v727
    %v854 = vmul.f32 %v497, %v732
    %v855 = vmul.f32 %v498, %v737
    %v856 = vmul.f32 %v499, %v742
    %v857 = vmul.f32 %v500, %v747
    %v858 = vmul.f32 %v501, %v752
    %v859 = vmul.f32 %v502, %v757
    %v860 = vmul.f32 %v503, %v762
    %v861 = vmul.f32 %v504, %v767
    %v862 = vmul.f32 %v505, %v772
    %v863 = vmul.f32 %v506, %v777
    %v864 = vmul.f32 %v507, %v782
    %v865 = vmul.f32 %v508, %v787
    %v866 = vmul.f32 %v509, %v792
    %v867 = vmul.f32 %v510, %v797
    %v868 = vmul.f32 %v511, %v802
    %v869 = vmul.f32 %v512, %v807
    %v870 = vmul.f32 %v513, %v812
    %v871 = vmul.f32 %v514, %v817
    %v872 = vmul.f32 %v515, %v822
    %v873 = vmul.f32 %v516, %v827
    %v874 = vmul.f32 %v517, %v832
    %v875 = vmul.f32 %v518, %v837
    %v876 = vmul.f32 %v519, %v842
    %v877 = vld [vmem:[%s5] sm:$0xff]
    %v878 = vld [vmem:[%s5 + $0x8] sm:$0xff]
    %v879 = vld [vmem:[%s5 + $0x10] sm:$0xff]
    %v880 = vld [vmem:[%s5 + $0x18] sm:$0xff]
    %v881 = vld [vmem:[%s5 + $0x20] sm:$0xff]
    %v882 = vld [vmem:[%s5 + $0x28] sm:$0xff]
    %v883 = vld [vmem:[%s5 + $0x30] sm:$0xff]
    %v884 = vld [vmem:[%s5 + $0x38] sm:$0xff]
    %v885 = vld [vmem:[%s5 + $0x40] sm:$0xff]
    %v886 = vld [vmem:[%s5 + $0x48] sm:$0xff]
    %v887 = vld [vmem:[%s5 + $0x50] sm:$0xff]
    %v888 = vld [vmem:[%s5 + $0x58] sm:$0xff]
    %v889 = vld [vmem:[%s5 + $0x60] sm:$0xff]
    %v890 = vld [vmem:[%s5 + $0x68] sm:$0xff]
    %v891 = vld [vmem:[%s5 + $0x70] sm:$0xff]
    %v892 = vld [vmem:[%s5 + $0x78] sm:$0xff]
    %893 = vmatprep.subr.mxu0 0.0
    %894 = vmatpush1.msra.mxu0 %v892
    %895 = vmatprep.subr.mxu0 0.0
    %896 = vmatpush1.msra.mxu0 %v891
    %897 = vmatprep.subr.mxu0 0.0
    %898 = vmatpush1.msra.mxu0 %v890
    %899 = vmatprep.subr.mxu0 0.0
    %900 = vmatpush1.msra.mxu0 %v889
    %901 = vmatprep.subr.mxu0 0.0
    %902 = vmatpush1.msra.mxu0 %v888
    %903 = vmatprep.subr.mxu0 0.0
    %904 = vmatpush1.msra.mxu0 %v887
    %905 = vmatprep.subr.mxu0 0.0
    %906 = vmatpush1.msra.mxu0 %v886
    %907 = vmatprep.subr.mxu0 0.0
    %908 = vmatpush1.msra.mxu0 %v885
    %909 = vmatprep.subr.mxu0 0.0
    %910 = vmatpush1.msra.mxu0 %v884
    %911 = vmatprep.subr.mxu0 0.0
    %912 = vmatpush1.msra.mxu0 %v883
    %913 = vmatprep.subr.mxu0 0.0
    %914 = vmatpush1.msra.mxu0 %v882
    %915 = vmatprep.subr.mxu0 0.0
    %916 = vmatpush1.msra.mxu0 %v881
    %917 = vmatprep.subr.mxu0 0.0
    %918 = vmatpush1.msra.mxu0 %v880
    %919 = vmatprep.subr.mxu0 0.0
    %920 = vmatpush1.msra.mxu0 %v879
    %921 = vmatprep.subr.mxu0 0.0
    %922 = vmatpush1.msra.mxu0 %v878
    %923 = vmatprep.subr.mxu0 0.0
    %924 = vmatpush1.msra.mxu0 %v877
    %925 = vmatprep.subr.mxu0 0.0
    %926 = vmatpush2.msra.mxu0 0.0
    %927 = vmatprep.subr.mxu0 0.0
    %928 = vmatpush2.msra.mxu0 0.0
    %929 = vmatprep.subr.mxu0 0.0
    %930 = vmatpush2.msra.mxu0 0.0
    %931 = vmatprep.subr.mxu0 0.0
    %932 = vmatpush2.msra.mxu0 0.0
    %933 = vmatprep.subr.mxu0 0.0
    %934 = vmatpush2.msra.mxu0 0.0
    %935 = vmatprep.subr.mxu0 0.0
    %936 = vmatpush2.msra.mxu0 0.0
    %937 = vmatprep.subr.mxu0 0.0
    %938 = vmatpush2.msra.mxu0 0.0
    %939 = vmatprep.subr.mxu0 0.0
    %940 = vmatpush2.msra.mxu0 0.0
    %941 = vmatprep.subr.mxu0 0.0
    %942 = vmatpush2.msra.mxu0 0.0
    %943 = vmatprep.subr.mxu0 0.0
    %944 = vmatpush2.msra.mxu0 0.0
    %945 = vmatprep.subr.mxu0 0.0
    %946 = vmatpush2.msra.mxu0 0.0
    %947 = vmatprep.subr.mxu0 0.0
    %948 = vmatpush2.msra.mxu0 0.0
    %949 = vmatprep.subr.mxu0 0.0
    %950 = vmatpush2.msra.mxu0 0.0
    %951 = vmatprep.subr.mxu0 0.0
    %952 = vmatpush2.msra.mxu0 0.0
    %953 = vmatprep.subr.mxu0 0.0
    %954 = vmatpush2.msra.mxu0 0.0
    %955 = vmatprep.subr.mxu0 0.0
    %956 = vmatpush2.msra.mxu0 0.0
    %957 = vmatprep.mubr.f32.mxu0 0.0
    %958 = vmatmul.mubr.f32.gmra.mxu0 %v845
    %v959 = vpop.f32.mrf.mxu0
    %v960 = vadd.f32 %v293, %v959
    %v961 = vpop.f32.mrf.mxu0
    %962 = vmatprep.mubr.f32.mxu0 0.0
    %963 = vmatmul.mubr.f32.gmra.mxu0 %v846
    %v964 = vpop.f32.mrf.mxu0
    %v965 = vadd.f32 %v299, %v964
    %v966 = vpop.f32.mrf.mxu0
    %967 = vmatprep.mubr.f32.mxu0 0.0
    %968 = vmatmul.mubr.f32.gmra.mxu0 %v847
    %v969 = vpop.f32.mrf.mxu0
    %v970 = vadd.f32 %v305, %v969
    %v971 = vpop.f32.mrf.mxu0
    %972 = vmatprep.mubr.f32.mxu0 0.0
    %973 = vmatmul.mubr.f32.gmra.mxu0 %v848
    %v974 = vpop.f32.mrf.mxu0
    %v975 = vadd.f32 %v311, %v974
    %v976 = vpop.f32.mrf.mxu0
    %977 = vmatprep.mubr.f32.mxu0 0.0
    %978 = vmatmul.mubr.f32.gmra.mxu0 %v849
    %v979 = vpop.f32.mrf.mxu0
    %v980 = vadd.f32 %v317, %v979
    %v981 = vpop.f32.mrf.mxu0
    %982 = vmatprep.mubr.f32.mxu0 0.0
    %983 = vmatmul.mubr.f32.gmra.mxu0 %v850
    %v984 = vpop.f32.mrf.mxu0
    %v985 = vadd.f32 %v323, %v984
    %v986 = vpop.f32.mrf.mxu0
    %987 = vmatprep.mubr.f32.mxu0 0.0
    %988 = vmatmul.mubr.f32.gmra.mxu0 %v851
    %v989 = vpop.f32.mrf.mxu0
    %v990 = vadd.f32 %v329, %v989
    %v991 = vpop.f32.mrf.mxu0
    %992 = vmatprep.mubr.f32.mxu0 0.0
    %993 = vmatmul.mubr.f32.gmra.mxu0 %v852
    %v994 = vpop.f32.mrf.mxu0
    %v995 = vadd.f32 %v335, %v994
    %v996 = vpop.f32.mrf.mxu0
    %997 = vmatprep.mubr.f32.mxu0 0.0
    %998 = vmatmul.mubr.f32.gmra.mxu0 %v853
    %v999 = vpop.f32.mrf.mxu0
    %v1000 = vadd.f32 %v341, %v999
    %v1001 = vpop.f32.mrf.mxu0
    %1002 = vmatprep.mubr.f32.mxu0 0.0
    %1003 = vmatmul.mubr.f32.gmra.mxu0 %v854
    %v1004 = vpop.f32.mrf.mxu0
    %v1005 = vadd.f32 %v347, %v1004
    %v1006 = vpop.f32.mrf.mxu0
    %1007 = vmatprep.mubr.f32.mxu0 0.0
    %1008 = vmatmul.mubr.f32.gmra.mxu0 %v855
    %v1009 = vpop.f32.mrf.mxu0
    %v1010 = vadd.f32 %v353, %v1009
    %v1011 = vpop.f32.mrf.mxu0
    %1012 = vmatprep.mubr.f32.mxu0 0.0
    %1013 = vmatmul.mubr.f32.gmra.mxu0 %v856
    %v1014 = vpop.f32.mrf.mxu0
    %v1015 = vadd.f32 %v359, %v1014
    %v1016 = vpop.f32.mrf.mxu0
    %1017 = vmatprep.mubr.f32.mxu0 0.0
    %1018 = vmatmul.mubr.f32.gmra.mxu0 %v857
    %v1019 = vpop.f32.mrf.mxu0
    %v1020 = vadd.f32 %v365, %v1019
    %v1021 = vpop.f32.mrf.mxu0
    %1022 = vmatprep.mubr.f32.mxu0 0.0
    %1023 = vmatmul.mubr.f32.gmra.mxu0 %v858
    %v1024 = vpop.f32.mrf.mxu0
    %v1025 = vadd.f32 %v371, %v1024
    %v1026 = vpop.f32.mrf.mxu0
    %1027 = vmatprep.mubr.f32.mxu0 0.0
    %1028 = vmatmul.mubr.f32.gmra.mxu0 %v859
    %v1029 = vpop.f32.mrf.mxu0
    %v1030 = vadd.f32 %v377, %v1029
    %v1031 = vpop.f32.mrf.mxu0
    %1032 = vmatprep.mubr.f32.mxu0 0.0
    %1033 = vmatmul.mubr.f32.gmra.mxu0 %v860
    %v1034 = vpop.f32.mrf.mxu0
    %v1035 = vadd.f32 %v383, %v1034
    %v1036 = vpop.f32.mrf.mxu0
    %1037 = vmatprep.mubr.f32.mxu0 0.0
    %1038 = vmatmul.mubr.f32.gmra.mxu0 %v861
    %v1039 = vpop.f32.mrf.mxu0
    %v1040 = vadd.f32 %v389, %v1039
    %v1041 = vpop.f32.mrf.mxu0
    %1042 = vmatprep.mubr.f32.mxu0 0.0
    %1043 = vmatmul.mubr.f32.gmra.mxu0 %v862
    %v1044 = vpop.f32.mrf.mxu0
    %v1045 = vadd.f32 %v395, %v1044
    %v1046 = vpop.f32.mrf.mxu0
    %1047 = vmatprep.mubr.f32.mxu0 0.0
    %1048 = vmatmul.mubr.f32.gmra.mxu0 %v863
    %v1049 = vpop.f32.mrf.mxu0
    %v1050 = vadd.f32 %v401, %v1049
    %v1051 = vpop.f32.mrf.mxu0
    %1052 = vmatprep.mubr.f32.mxu0 0.0
    %1053 = vmatmul.mubr.f32.gmra.mxu0 %v864
    %v1054 = vpop.f32.mrf.mxu0
    %v1055 = vadd.f32 %v407, %v1054
    %v1056 = vpop.f32.mrf.mxu0
    %1057 = vmatprep.mubr.f32.mxu0 0.0
    %1058 = vmatmul.mubr.f32.gmra.mxu0 %v865
    %v1059 = vpop.f32.mrf.mxu0
    %v1060 = vadd.f32 %v413, %v1059
    %v1061 = vpop.f32.mrf.mxu0
    %1062 = vmatprep.mubr.f32.mxu0 0.0
    %1063 = vmatmul.mubr.f32.gmra.mxu0 %v866
    %v1064 = vpop.f32.mrf.mxu0
    %v1065 = vadd.f32 %v419, %v1064
    %v1066 = vpop.f32.mrf.mxu0
    %1067 = vmatprep.mubr.f32.mxu0 0.0
    %1068 = vmatmul.mubr.f32.gmra.mxu0 %v867
    %v1069 = vpop.f32.mrf.mxu0
    %v1070 = vadd.f32 %v425, %v1069
    %v1071 = vpop.f32.mrf.mxu0
    %1072 = vmatprep.mubr.f32.mxu0 0.0
    %1073 = vmatmul.mubr.f32.gmra.mxu0 %v868
    %v1074 = vpop.f32.mrf.mxu0
    %v1075 = vadd.f32 %v431, %v1074
    %v1076 = vpop.f32.mrf.mxu0
    %1077 = vmatprep.mubr.f32.mxu0 0.0
    %1078 = vmatmul.mubr.f32.gmra.mxu0 %v869
    %v1079 = vpop.f32.mrf.mxu0
    %v1080 = vadd.f32 %v437, %v1079
    %v1081 = vpop.f32.mrf.mxu0
    %1082 = vmatprep.mubr.f32.mxu0 0.0
    %1083 = vmatmul.mubr.f32.gmra.mxu0 %v870
    %v1084 = vpop.f32.mrf.mxu0
    %v1085 = vadd.f32 %v443, %v1084
    %v1086 = vpop.f32.mrf.mxu0
    %1087 = vmatprep.mubr.f32.mxu0 0.0
    %1088 = vmatmul.mubr.f32.gmra.mxu0 %v871
    %v1089 = vpop.f32.mrf.mxu0
    %v1090 = vadd.f32 %v449, %v1089
    %v1091 = vpop.f32.mrf.mxu0
    %1092 = vmatprep.mubr.f32.mxu0 0.0
    %1093 = vmatmul.mubr.f32.gmra.mxu0 %v872
    %v1094 = vpop.f32.mrf.mxu0
    %v1095 = vadd.f32 %v455, %v1094
    %v1096 = vpop.f32.mrf.mxu0
    %1097 = vmatprep.mubr.f32.mxu0 0.0
    %1098 = vmatmul.mubr.f32.gmra.mxu0 %v873
    %v1099 = vpop.f32.mrf.mxu0
    %v1100 = vadd.f32 %v461, %v1099
    %v1101 = vpop.f32.mrf.mxu0
    %1102 = vmatprep.mubr.f32.mxu0 0.0
    %1103 = vmatmul.mubr.f32.gmra.mxu0 %v874
    %v1104 = vpop.f32.mrf.mxu0
    %v1105 = vadd.f32 %v467, %v1104
    %v1106 = vpop.f32.mrf.mxu0
    %1107 = vmatprep.mubr.f32.mxu0 0.0
    %1108 = vmatmul.mubr.f32.gmra.mxu0 %v875
    %v1109 = vpop.f32.mrf.mxu0
    %v1110 = vadd.f32 %v473, %v1109
    %v1111 = vpop.f32.mrf.mxu0
    %1112 = vmatprep.mubr.f32.mxu0 0.0
    %1113 = vmatmul.mubr.f32.gmra.mxu0 %v876
    %v1114 = vpop.f32.mrf.mxu0
    %v1115 = vadd.f32 %v479, %v1114
    %v1116 = vpop.f32.mrf.mxu0
    %1117 = vdwg.mxu0
    %vm1118 = vcmask 31744
    %v1119 = vsel %vm1118, %v960, -inf
    %v1120 = vsel %vm1118, %v965, -inf
    %v1121 = vmax.f32 %v1119, %v1120
    %v1122 = vrot.slane %v1121, 4
    %v1123 = vmax.f32 %v1121, %v1122
    %v1124 = vrot.slane %v1123, 2
    %v1125 = vmax.f32 %v1123, %v1124
    %v1126 = vrot.slane %v1125, 1
    %v1127 = vmax.f32 %v1125, %v1126
    %v1128 = vsel %vm1118, %v970, -inf
    %v1129 = vsel %vm1118, %v975, -inf
    %v1130 = vmax.f32 %v1128, %v1129
    %v1131 = vrot.slane %v1130, 4
    %v1132 = vmax.f32 %v1130, %v1131
    %v1133 = vrot.slane %v1132, 2
    %v1134 = vmax.f32 %v1132, %v1133
    %v1135 = vrot.slane %v1134, 1
    %v1136 = vmax.f32 %v1134, %v1135
    %v1137 = vsel %vm1118, %v980, -inf
    %v1138 = vsel %vm1118, %v985, -inf
    %v1139 = vmax.f32 %v1137, %v1138
    %v1140 = vrot.slane %v1139, 4
    %v1141 = vmax.f32 %v1139, %v1140
    %v1142 = vrot.slane %v1141, 2
    %v1143 = vmax.f32 %v1141, %v1142
    %v1144 = vrot.slane %v1143, 1
    %v1145 = vmax.f32 %v1143, %v1144
    %v1146 = vsel %vm1118, %v990, -inf
    %v1147 = vsel %vm1118, %v995, -inf
    %v1148 = vmax.f32 %v1146, %v1147
    %v1149 = vrot.slane %v1148, 4
    %v1150 = vmax.f32 %v1148, %v1149
    %v1151 = vrot.slane %v1150, 2
    %v1152 = vmax.f32 %v1150, %v1151
    %v1153 = vrot.slane %v1152, 1
    %v1154 = vmax.f32 %v1152, %v1153
    %v1155 = vsel %vm1118, %v1000, -inf
    %v1156 = vsel %vm1118, %v1005, -inf
    %v1157 = vmax.f32 %v1155, %v1156
    %v1158 = vrot.slane %v1157, 4
    %v1159 = vmax.f32 %v1157, %v1158
    %v1160 = vrot.slane %v1159, 2
    %v1161 = vmax.f32 %v1159, %v1160
    %v1162 = vrot.slane %v1161, 1
    %v1163 = vmax.f32 %v1161, %v1162
    %v1164 = vsel %vm1118, %v1010, -inf
    %v1165 = vsel %vm1118, %v1015, -inf
    %v1166 = vmax.f32 %v1164, %v1165
    %v1167 = vrot.slane %v1166, 4
    %v1168 = vmax.f32 %v1166, %v1167
    %v1169 = vrot.slane %v1168, 2
    %v1170 = vmax.f32 %v1168, %v1169
    %v1171 = vrot.slane %v1170, 1
    %v1172 = vmax.f32 %v1170, %v1171
    %v1173 = vsel %vm1118, %v1020, -inf
    %v1174 = vsel %vm1118, %v1025, -inf
    %v1175 = vmax.f32 %v1173, %v1174
    %v1176 = vrot.slane %v1175, 4
    %v1177 = vmax.f32 %v1175, %v1176
    %v1178 = vrot.slane %v1177, 2
    %v1179 = vmax.f32 %v1177, %v1178
    %v1180 = vrot.slane %v1179, 1
    %v1181 = vmax.f32 %v1179, %v1180
    %v1182 = vsel %vm1118, %v1030, -inf
    %v1183 = vsel %vm1118, %v1035, -inf
    %v1184 = vmax.f32 %v1182, %v1183
    %v1185 = vrot.slane %v1184, 4
    %v1186 = vmax.f32 %v1184, %v1185
    %v1187 = vrot.slane %v1186, 2
    %v1188 = vmax.f32 %v1186, %v1187
    %v1189 = vrot.slane %v1188, 1
    %v1190 = vmax.f32 %v1188, %v1189
    %v1191 = vsel %vm1118, %v1040, -inf
    %v1192 = vsel %vm1118, %v1045, -inf
    %v1193 = vmax.f32 %v1191, %v1192
    %v1194 = vrot.slane %v1193, 4
    %v1195 = vmax.f32 %v1193, %v1194
    %v1196 = vrot.slane %v1195, 2
    %v1197 = vmax.f32 %v1195, %v1196
    %v1198 = vrot.slane %v1197, 1
    %v1199 = vmax.f32 %v1197, %v1198
    %v1200 = vsel %vm1118, %v1050, -inf
    %v1201 = vsel %vm1118, %v1055, -inf
    %v1202 = vmax.f32 %v1200, %v1201
    %v1203 = vrot.slane %v1202, 4
    %v1204 = vmax.f32 %v1202, %v1203
    %v1205 = vrot.slane %v1204, 2
    %v1206 = vmax.f32 %v1204, %v1205
    %v1207 = vrot.slane %v1206, 1
    %v1208 = vmax.f32 %v1206, %v1207
    %v1209 = vsel %vm1118, %v1060, -inf
    %v1210 = vsel %vm1118, %v1065, -inf
    %v1211 = vmax.f32 %v1209, %v1210
    %v1212 = vrot.slane %v1211, 4
    %v1213 = vmax.f32 %v1211, %v1212
    %v1214 = vrot.slane %v1213, 2
    %v1215 = vmax.f32 %v1213, %v1214
    %v1216 = vrot.slane %v1215, 1
    %v1217 = vmax.f32 %v1215, %v1216
    %v1218 = vsel %vm1118, %v1070, -inf
    %v1219 = vsel %vm1118, %v1075, -inf
    %v1220 = vmax.f32 %v1218, %v1219
    %v1221 = vrot.slane %v1220, 4
    %v1222 = vmax.f32 %v1220, %v1221
    %v1223 = vrot.slane %v1222, 2
    %v1224 = vmax.f32 %v1222, %v1223
    %v1225 = vrot.slane %v1224, 1
    %v1226 = vmax.f32 %v1224, %v1225
    %v1227 = vsel %vm1118, %v1080, -inf
    %v1228 = vsel %vm1118, %v1085, -inf
    %v1229 = vmax.f32 %v1227, %v1228
    %v1230 = vrot.slane %v1229, 4
    %v1231 = vmax.f32 %v1229, %v1230
    %v1232 = vrot.slane %v1231, 2
    %v1233 = vmax.f32 %v1231, %v1232
    %v1234 = vrot.slane %v1233, 1
    %v1235 = vmax.f32 %v1233, %v1234
    %v1236 = vsel %vm1118, %v1090, -inf
    %v1237 = vsel %vm1118, %v1095, -inf
    %v1238 = vmax.f32 %v1236, %v1237
    %v1239 = vrot.slane %v1238, 4
    %v1240 = vmax.f32 %v1238, %v1239
    %v1241 = vrot.slane %v1240, 2
    %v1242 = vmax.f32 %v1240, %v1241
    %v1243 = vrot.slane %v1242, 1
    %v1244 = vmax.f32 %v1242, %v1243
    %v1245 = vsel %vm1118, %v1100, -inf
    %v1246 = vsel %vm1118, %v1105, -inf
    %v1247 = vmax.f32 %v1245, %v1246
    %v1248 = vrot.slane %v1247, 4
    %v1249 = vmax.f32 %v1247, %v1248
    %v1250 = vrot.slane %v1249, 2
    %v1251 = vmax.f32 %v1249, %v1250
    %v1252 = vrot.slane %v1251, 1
    %v1253 = vmax.f32 %v1251, %v1252
    %v1254 = vsel %vm1118, %v1110, -inf
    %v1255 = vsel %vm1118, %v1115, -inf
    %v1256 = vmax.f32 %v1254, %v1255
    %v1257 = vrot.slane %v1256, 4
    %v1258 = vmax.f32 %v1256, %v1257
    %v1259 = vrot.slane %v1258, 2
    %v1260 = vmax.f32 %v1258, %v1259
    %v1261 = vrot.slane %v1260, 1
    %v1262 = vmax.f32 %v1260, %v1261
    %v1263 = vsub.f32 %v960, %v1127
    %v1264 = vsub.f32 %v965, %v1127
    %v1265 = vsub.f32 %v970, %v1136
    %v1266 = vsub.f32 %v975, %v1136
    %v1267 = vsub.f32 %v980, %v1145
    %v1268 = vsub.f32 %v985, %v1145
    %v1269 = vsub.f32 %v990, %v1154
    %v1270 = vsub.f32 %v995, %v1154
    %v1271 = vsub.f32 %v1000, %v1163
    %v1272 = vsub.f32 %v1005, %v1163
    %v1273 = vsub.f32 %v1010, %v1172
    %v1274 = vsub.f32 %v1015, %v1172
    %v1275 = vsub.f32 %v1020, %v1181
    %v1276 = vsub.f32 %v1025, %v1181
    %v1277 = vsub.f32 %v1030, %v1190
    %v1278 = vsub.f32 %v1035, %v1190
    %v1279 = vsub.f32 %v1040, %v1199
    %v1280 = vsub.f32 %v1045, %v1199
    %v1281 = vsub.f32 %v1050, %v1208
    %v1282 = vsub.f32 %v1055, %v1208
    %v1283 = vsub.f32 %v1060, %v1217
    %v1284 = vsub.f32 %v1065, %v1217
    %v1285 = vsub.f32 %v1070, %v1226
    %v1286 = vsub.f32 %v1075, %v1226
    %v1287 = vsub.f32 %v1080, %v1235
    %v1288 = vsub.f32 %v1085, %v1235
    %v1289 = vsub.f32 %v1090, %v1244
    %v1290 = vsub.f32 %v1095, %v1244
    %v1291 = vsub.f32 %v1100, %v1253
    %v1292 = vsub.f32 %v1105, %v1253
    %v1293 = vsub.f32 %v1110, %v1262
    %v1294 = vsub.f32 %v1115, %v1262
    %v1295 = vmul.f32 %v1263, 1.442695
    %v1296 = vpow.pop %v1295
    %v1297 = vmul.f32 %v1264, 1.442695
    %v1298 = vpow.pop %v1297
    %v1299 = vmul.f32 %v1265, 1.442695
    %v1300 = vpow.pop %v1299
    %v1301 = vmul.f32 %v1266, 1.442695
    %v1302 = vpow.pop %v1301
    %v1303 = vmul.f32 %v1267, 1.442695
    %v1304 = vpow.pop %v1303
    %v1305 = vmul.f32 %v1268, 1.442695
    %v1306 = vpow.pop %v1305
    %v1307 = vmul.f32 %v1269, 1.442695
    %v1308 = vpow.pop %v1307
    %v1309 = vmul.f32 %v1270, 1.442695
    %v1310 = vpow.pop %v1309
    %v1311 = vmul.f32 %v1271, 1.442695
    %v1312 = vpow.pop %v1311
    %v1313 = vmul.f32 %v1272, 1.442695
    %v1314 = vpow.pop %v1313
    %v1315 = vmul.f32 %v1273, 1.442695
    %v1316 = vpow.pop %v1315
    %v1317 = vmul.f32 %v1274, 1.442695
    %v1318 = vpow.pop %v1317
    %v1319 = vmul.f32 %v1275, 1.442695
    %v1320 = vpow.pop %v1319
    %v1321 = vmul.f32 %v1276, 1.442695
    %v1322 = vpow.pop %v1321
    %v1323 = vmul.f32 %v1277, 1.442695
    %v1324 = vpow.pop %v1323
    %v1325 = vmul.f32 %v1278, 1.442695
    %v1326 = vpow.pop %v1325
    %v1327 = vmul.f32 %v1279, 1.442695
    %v1328 = vpow.pop %v1327
    %v1329 = vmul.f32 %v1280, 1.442695
    %v1330 = vpow.pop %v1329
    %v1331 = vmul.f32 %v1281, 1.442695
    %v1332 = vpow.pop %v1331
    %v1333 = vmul.f32 %v1282, 1.442695
    %v1334 = vpow.pop %v1333
    %v1335 = vmul.f32 %v1283, 1.442695
    %v1336 = vpow.pop %v1335
    %v1337 = vmul.f32 %v1284, 1.442695
    %v1338 = vpow.pop %v1337
    %v1339 = vmul.f32 %v1285, 1.442695
    %v1340 = vpow.pop %v1339
    %v1341 = vmul.f32 %v1286, 1.442695
    %v1342 = vpow.pop %v1341
    %v1343 = vmul.f32 %v1287, 1.442695
    %v1344 = vpow.pop %v1343
    %v1345 = vmul.f32 %v1288, 1.442695
    %v1346 = vpow.pop %v1345
    %v1347 = vmul.f32 %v1289, 1.442695
    %v1348 = vpow.pop %v1347
    %v1349 = vmul.f32 %v1290, 1.442695
    %v1350 = vpow.pop %v1349
    %v1351 = vmul.f32 %v1291, 1.442695
    %v1352 = vpow.pop %v1351
    %v1353 = vmul.f32 %v1292, 1.442695
    %v1354 = vpow.pop %v1353
    %v1355 = vmul.f32 %v1293, 1.442695
    %v1356 = vpow.pop %v1355
    %v1357 = vmul.f32 %v1294, 1.442695
    %v1358 = vpow.pop %v1357
    %v1359 = vsel %vm1118, %v1296, 0.0
    %v1360 = vsel %vm1118, %v1298, 0.0
    %v1361 = vadd.f32 %v1359, %v1360
    %v1362 = vrot.slane %v1361, 4
    %v1363 = vadd.f32 %v1361, %v1362
    %v1364 = vrot.slane %v1363, 2
    %v1365 = vadd.f32 %v1363, %v1364
    %v1366 = vrot.slane %v1365, 1
    %v1367 = vadd.f32 %v1365, %v1366
    %v1368 = vsel %vm1118, %v1300, 0.0
    %v1369 = vsel %vm1118, %v1302, 0.0
    %v1370 = vadd.f32 %v1368, %v1369
    %v1371 = vrot.slane %v1370, 4
    %v1372 = vadd.f32 %v1370, %v1371
    %v1373 = vrot.slane %v1372, 2
    %v1374 = vadd.f32 %v1372, %v1373
    %v1375 = vrot.slane %v1374, 1
    %v1376 = vadd.f32 %v1374, %v1375
    %v1377 = vsel %vm1118, %v1304, 0.0
    %v1378 = vsel %vm1118, %v1306, 0.0
    %v1379 = vadd.f32 %v1377, %v1378
    %v1380 = vrot.slane %v1379, 4
    %v1381 = vadd.f32 %v1379, %v1380
    %v1382 = vrot.slane %v1381, 2
    %v1383 = vadd.f32 %v1381, %v1382
    %v1384 = vrot.slane %v1383, 1
    %v1385 = vadd.f32 %v1383, %v1384
    %v1386 = vsel %vm1118, %v1308, 0.0
    %v1387 = vsel %vm1118, %v1310, 0.0
    %v1388 = vadd.f32 %v1386, %v1387
    %v1389 = vrot.slane %v1388, 4
    %v1390 = vadd.f32 %v1388, %v1389
    %v1391 = vrot.slane %v1390, 2
    %v1392 = vadd.f32 %v1390, %v1391
    %v1393 = vrot.slane %v1392, 1
    %v1394 = vadd.f32 %v1392, %v1393
    %v1395 = vsel %vm1118, %v1312, 0.0
    %v1396 = vsel %vm1118, %v1314, 0.0
    %v1397 = vadd.f32 %v1395, %v1396
    %v1398 = vrot.slane %v1397, 4
    %v1399 = vadd.f32 %v1397, %v1398
    %v1400 = vrot.slane %v1399, 2
    %v1401 = vadd.f32 %v1399, %v1400
    %v1402 = vrot.slane %v1401, 1
    %v1403 = vadd.f32 %v1401, %v1402
    %v1404 = vsel %vm1118, %v1316, 0.0
    %v1405 = vsel %vm1118, %v1318, 0.0
    %v1406 = vadd.f32 %v1404, %v1405
    %v1407 = vrot.slane %v1406, 4
    %v1408 = vadd.f32 %v1406, %v1407
    %v1409 = vrot.slane %v1408, 2
    %v1410 = vadd.f32 %v1408, %v1409
    %v1411 = vrot.slane %v1410, 1
    %v1412 = vadd.f32 %v1410, %v1411
    %v1413 = vsel %vm1118, %v1320, 0.0
    %v1414 = vsel %vm1118, %v1322, 0.0
    %v1415 = vadd.f32 %v1413, %v1414
    %v1416 = vrot.slane %v1415, 4
    %v1417 = vadd.f32 %v1415, %v1416
    %v1418 = vrot.slane %v1417, 2
    %v1419 = vadd.f32 %v1417, %v1418
    %v1420 = vrot.slane %v1419, 1
    %v1421 = vadd.f32 %v1419, %v1420
    %v1422 = vsel %vm1118, %v1324, 0.0
    %v1423 = vsel %vm1118, %v1326, 0.0
    %v1424 = vadd.f32 %v1422, %v1423
    %v1425 = vrot.slane %v1424, 4
    %v1426 = vadd.f32 %v1424, %v1425
    %v1427 = vrot.slane %v1426, 2
    %v1428 = vadd.f32 %v1426, %v1427
    %v1429 = vrot.slane %v1428, 1
    %v1430 = vadd.f32 %v1428, %v1429
    %v1431 = vsel %vm1118, %v1328, 0.0
    %v1432 = vsel %vm1118, %v1330, 0.0
    %v1433 = vadd.f32 %v1431, %v1432
    %v1434 = vrot.slane %v1433, 4
    %v1435 = vadd.f32 %v1433, %v1434
    %v1436 = vrot.slane %v1435, 2
    %v1437 = vadd.f32 %v1435, %v1436
    %v1438 = vrot.slane %v1437, 1
    %v1439 = vadd.f32 %v1437, %v1438
    %v1440 = vsel %vm1118, %v1332, 0.0
    %v1441 = vsel %vm1118, %v1334, 0.0
    %v1442 = vadd.f32 %v1440, %v1441
    %v1443 = vrot.slane %v1442, 4
    %v1444 = vadd.f32 %v1442, %v1443
    %v1445 = vrot.slane %v1444, 2
    %v1446 = vadd.f32 %v1444, %v1445
    %v1447 = vrot.slane %v1446, 1
    %v1448 = vadd.f32 %v1446, %v1447
    %v1449 = vsel %vm1118, %v1336, 0.0
    %v1450 = vsel %vm1118, %v1338, 0.0
    %v1451 = vadd.f32 %v1449, %v1450
    %v1452 = vrot.slane %v1451, 4
    %v1453 = vadd.f32 %v1451, %v1452
    %v1454 = vrot.slane %v1453, 2
    %v1455 = vadd.f32 %v1453, %v1454
    %v1456 = vrot.slane %v1455, 1
    %v1457 = vadd.f32 %v1455, %v1456
    %v1458 = vsel %vm1118, %v1340, 0.0
    %v1459 = vsel %vm1118, %v1342, 0.0
    %v1460 = vadd.f32 %v1458, %v1459
    %v1461 = vrot.slane %v1460, 4
    %v1462 = vadd.f32 %v1460, %v1461
    %v1463 = vrot.slane %v1462, 2
    %v1464 = vadd.f32 %v1462, %v1463
    %v1465 = vrot.slane %v1464, 1
    %v1466 = vadd.f32 %v1464, %v1465
    %v1467 = vsel %vm1118, %v1344, 0.0
    %v1468 = vsel %vm1118, %v1346, 0.0
    %v1469 = vadd.f32 %v1467, %v1468
    %v1470 = vrot.slane %v1469, 4
    %v1471 = vadd.f32 %v1469, %v1470
    %v1472 = vrot.slane %v1471, 2
    %v1473 = vadd.f32 %v1471, %v1472
    %v1474 = vrot.slane %v1473, 1
    %v1475 = vadd.f32 %v1473, %v1474
    %v1476 = vsel %vm1118, %v1348, 0.0
    %v1477 = vsel %vm1118, %v1350, 0.0
    %v1478 = vadd.f32 %v1476, %v1477
    %v1479 = vrot.slane %v1478, 4
    %v1480 = vadd.f32 %v1478, %v1479
    %v1481 = vrot.slane %v1480, 2
    %v1482 = vadd.f32 %v1480, %v1481
    %v1483 = vrot.slane %v1482, 1
    %v1484 = vadd.f32 %v1482, %v1483
    %v1485 = vsel %vm1118, %v1352, 0.0
    %v1486 = vsel %vm1118, %v1354, 0.0
    %v1487 = vadd.f32 %v1485, %v1486
    %v1488 = vrot.slane %v1487, 4
    %v1489 = vadd.f32 %v1487, %v1488
    %v1490 = vrot.slane %v1489, 2
    %v1491 = vadd.f32 %v1489, %v1490
    %v1492 = vrot.slane %v1491, 1
    %v1493 = vadd.f32 %v1491, %v1492
    %v1494 = vsel %vm1118, %v1356, 0.0
    %v1495 = vsel %vm1118, %v1358, 0.0
    %v1496 = vadd.f32 %v1494, %v1495
    %v1497 = vrot.slane %v1496, 4
    %v1498 = vadd.f32 %v1496, %v1497
    %v1499 = vrot.slane %v1498, 2
    %v1500 = vadd.f32 %v1498, %v1499
    %v1501 = vrot.slane %v1500, 1
    %v1502 = vadd.f32 %v1500, %v1501
    %v1503 = vrcp.pop %v1367
    %v1504 = vmul.f32 %v1296, %v1503
    %v1505 = vmul.f32 %v1298, %v1503
    %v1506 = vrcp.pop %v1376
    %v1507 = vmul.f32 %v1300, %v1506
    %v1508 = vmul.f32 %v1302, %v1506
    %v1509 = vrcp.pop %v1385
    %v1510 = vmul.f32 %v1304, %v1509
    %v1511 = vmul.f32 %v1306, %v1509
    %v1512 = vrcp.pop %v1394
    %v1513 = vmul.f32 %v1308, %v1512
    %v1514 = vmul.f32 %v1310, %v1512
    %v1515 = vrcp.pop %v1403
    %v1516 = vmul.f32 %v1312, %v1515
    %v1517 = vmul.f32 %v1314, %v1515
    %v1518 = vrcp.pop %v1412
    %v1519 = vmul.f32 %v1316, %v1518
    %v1520 = vmul.f32 %v1318, %v1518
    %v1521 = vrcp.pop %v1421
    %v1522 = vmul.f32 %v1320, %v1521
    %v1523 = vmul.f32 %v1322, %v1521
    %v1524 = vrcp.pop %v1430
    %v1525 = vmul.f32 %v1324, %v1524
    %v1526 = vmul.f32 %v1326, %v1524
    %v1527 = vrcp.pop %v1439
    %v1528 = vmul.f32 %v1328, %v1527
    %v1529 = vmul.f32 %v1330, %v1527
    %v1530 = vrcp.pop %v1448
    %v1531 = vmul.f32 %v1332, %v1530
    %v1532 = vmul.f32 %v1334, %v1530
    %v1533 = vrcp.pop %v1457
    %v1534 = vmul.f32 %v1336, %v1533
    %v1535 = vmul.f32 %v1338, %v1533
    %v1536 = vrcp.pop %v1466
    %v1537 = vmul.f32 %v1340, %v1536
    %v1538 = vmul.f32 %v1342, %v1536
    %v1539 = vrcp.pop %v1475
    %v1540 = vmul.f32 %v1344, %v1539
    %v1541 = vmul.f32 %v1346, %v1539
    %v1542 = vrcp.pop %v1484
    %v1543 = vmul.f32 %v1348, %v1542
    %v1544 = vmul.f32 %v1350, %v1542
    %v1545 = vrcp.pop %v1493
    %v1546 = vmul.f32 %v1352, %v1545
    %v1547 = vmul.f32 %v1354, %v1545
    %v1548 = vrcp.pop %v1502
    %v1549 = vmul.f32 %v1356, %v1548
    %v1550 = vmul.f32 %v1358, %v1548
    %v1551 = vld [vmem:[%s6] sm:$0xf]
    %v1553 = vsel %vm1118, %v1504, 0
    %v1556 = vsel %vm1118, %v1505, 0
    %v1559 = vsel %vm1118, %v1507, 0
    %v1562 = vsel %vm1118, %v1508, 0
    %v1565 = vsel %vm1118, %v1510, 0
    %v1568 = vsel %vm1118, %v1511, 0
    %v1571 = vsel %vm1118, %v1513, 0
    %v1574 = vsel %vm1118, %v1514, 0
    %v1577 = vsel %vm1118, %v1516, 0
    %v1580 = vsel %vm1118, %v1517, 0
    %v1583 = vsel %vm1118, %v1519, 0
    %v1586 = vsel %vm1118, %v1520, 0
    %v1589 = vsel %vm1118, %v1522, 0
    %v1592 = vsel %vm1118, %v1523, 0
    %v1595 = vsel %vm1118, %v1525, 0
    %v1598 = vsel %vm1118, %v1526, 0
    %v1601 = vsel %vm1118, %v1528, 0
    %v1604 = vsel %vm1118, %v1529, 0
    %v1607 = vsel %vm1118, %v1531, 0
    %v1610 = vsel %vm1118, %v1532, 0
    %v1613 = vsel %vm1118, %v1534, 0
    %v1616 = vsel %vm1118, %v1535, 0
    %v1619 = vsel %vm1118, %v1537, 0
    %v1622 = vsel %vm1118, %v1538, 0
    %v1625 = vsel %vm1118, %v1540, 0
    %v1628 = vsel %vm1118, %v1541, 0
    %v1631 = vsel %vm1118, %v1543, 0
    %v1634 = vsel %vm1118, %v1544, 0
    %v1637 = vsel %vm1118, %v1546, 0
    %v1640 = vsel %vm1118, %v1547, 0
    %v1643 = vsel %vm1118, %v1549, 0
    %v1646 = vsel %vm1118, %v1550, 0
    %vm1648 = vcmask 1043456
    %v1650 = vsel %vm1648, %v1551, 0
    %1652 = vmatprep.subr.mxu0 0.0
    %1653 = vmatpush1.msra.mxu0 0.0
    %1654 = vmatprep.subr.mxu0 0.0
    %1655 = vmatpush1.msra.mxu0 0.0
    %1656 = vmatprep.subr.mxu0 0.0
    %1657 = vmatpush1.msra.mxu0 0.0
    %1658 = vmatprep.subr.mxu0 0.0
    %1659 = vmatpush1.msra.mxu0 0.0
    %1660 = vmatprep.subr.mxu0 0.0
    %1661 = vmatpush1.msra.mxu0 0.0
    %1662 = vmatprep.subr.mxu0 0.0
    %1663 = vmatpush1.msra.mxu0 0.0
    %1664 = vmatprep.subr.mxu0 0.0
    %1665 = vmatpush1.msra.mxu0 0.0
    %1666 = vmatprep.subr.mxu0 0.0
    %1667 = vmatpush1.msra.mxu0 0.0
    %1668 = vmatprep.subr.mxu0 0.0
    %1669 = vmatpush1.msra.mxu0 0.0
    %1670 = vmatprep.subr.mxu0 0.0
    %1671 = vmatpush1.msra.mxu0 0.0
    %1672 = vmatprep.subr.mxu0 0.0
    %1673 = vmatpush1.msra.mxu0 0.0
    %1674 = vmatprep.subr.mxu0 0.0
    %1675 = vmatpush1.msra.mxu0 0.0
    %1676 = vmatprep.subr.mxu0 0.0
    %1677 = vmatpush1.msra.mxu0 0.0
    %1678 = vmatprep.subr.mxu0 0.0
    %1679 = vmatpush1.msra.mxu0 0.0
    %1680 = vmatprep.subr.mxu0 0.0
    %1681 = vmatpush1.msra.mxu0 0.0
    %1682 = vmatprep.subr.mxu0 0.0
    %1683 = vmatpush1.msra.mxu0 %v1650
    %1684 = vmatprep.subr.mxu0 0.0
    %1685 = vmatpush2.msra.mxu0 0.0
    %1686 = vmatprep.subr.mxu0 0.0
    %1687 = vmatpush2.msra.mxu0 0.0
    %1688 = vmatprep.subr.mxu0 0.0
    %1689 = vmatpush2.msra.mxu0 0.0
    %1690 = vmatprep.subr.mxu0 0.0
    %1691 = vmatpush2.msra.mxu0 0.0
    %1692 = vmatprep.subr.mxu0 0.0
    %1693 = vmatpush2.msra.mxu0 0.0
    %1694 = vmatprep.subr.mxu0 0.0
    %1695 = vmatpush2.msra.mxu0 0.0
    %1696 = vmatprep.subr.mxu0 0.0
    %1697 = vmatpush2.msra.mxu0 0.0
    %1698 = vmatprep.subr.mxu0 0.0
    %1699 = vmatpush2.msra.mxu0 0.0
    %1700 = vmatprep.subr.mxu0 0.0
    %1701 = vmatpush2.msra.mxu0 0.0
    %1702 = vmatprep.subr.mxu0 0.0
    %1703 = vmatpush2.msra.mxu0 0.0
    %1704 = vmatprep.subr.mxu0 0.0
    %1705 = vmatpush2.msra.mxu0 0.0
    %1706 = vmatprep.subr.mxu0 0.0
    %1707 = vmatpush2.msra.mxu0 0.0
    %1708 = vmatprep.subr.mxu0 0.0
    %1709 = vmatpush2.msra.mxu0 0.0
    %1710 = vmatprep.subr.mxu0 0.0
    %1711 = vmatpush2.msra.mxu0 0.0
    %1712 = vmatprep.subr.mxu0 0.0
    %1713 = vmatpush2.msra.mxu0 0.0
    %1714 = vmatprep.subr.mxu0 0.0
    %1715 = vmatpush2.msra.mxu0 0.0
    %1716 = vmatprep.mubr.f32.mxu0 0.0
    %1717 = vmatmul.mubr.f32.gmra.mxu0 %v1553
    %v1718 = vpop.f32.mrf.mxu0
    %v1719 = vadd.f32 0.0, %v1718
    %v1720 = vpop.f32.mrf.mxu0
    %1721 = vmatprep.mubr.f32.mxu0 0.0
    %1722 = vmatmul.mubr.f32.gmra.mxu0 %v1556
    %v1723 = vpop.f32.mrf.mxu0
    %v1724 = vadd.f32 0.0, %v1723
    %v1725 = vpop.f32.mrf.mxu0
    %1726 = vmatprep.mubr.f32.mxu0 0.0
    %1727 = vmatmul.mubr.f32.gmra.mxu0 %v1559
    %v1728 = vpop.f32.mrf.mxu0
    %v1729 = vadd.f32 0.0, %v1728
    %v1730 = vpop.f32.mrf.mxu0
    %1731 = vmatprep.mubr.f32.mxu0 0.0
    %1732 = vmatmul.mubr.f32.gmra.mxu0 %v1562
    %v1733 = vpop.f32.mrf.mxu0
    %v1734 = vadd.f32 0.0, %v1733
    %v1735 = vpop.f32.mrf.mxu0
    %1736 = vmatprep.mubr.f32.mxu0 0.0
    %1737 = vmatmul.mubr.f32.gmra.mxu0 %v1565
    %v1738 = vpop.f32.mrf.mxu0
    %v1739 = vadd.f32 0.0, %v1738
    %v1740 = vpop.f32.mrf.mxu0
    %1741 = vmatprep.mubr.f32.mxu0 0.0
    %1742 = vmatmul.mubr.f32.gmra.mxu0 %v1568
    %v1743 = vpop.f32.mrf.mxu0
    %v1744 = vadd.f32 0.0, %v1743
    %v1745 = vpop.f32.mrf.mxu0
    %1746 = vmatprep.mubr.f32.mxu0 0.0
    %1747 = vmatmul.mubr.f32.gmra.mxu0 %v1571
    %v1748 = vpop.f32.mrf.mxu0
    %v1749 = vadd.f32 0.0, %v1748
    %v1750 = vpop.f32.mrf.mxu0
    %1751 = vmatprep.mubr.f32.mxu0 0.0
    %1752 = vmatmul.mubr.f32.gmra.mxu0 %v1574
    %v1753 = vpop.f32.mrf.mxu0
    %v1754 = vadd.f32 0.0, %v1753
    %v1755 = vpop.f32.mrf.mxu0
    %1756 = vmatprep.mubr.f32.mxu0 0.0
    %1757 = vmatmul.mubr.f32.gmra.mxu0 %v1577
    %v1758 = vpop.f32.mrf.mxu0
    %v1759 = vadd.f32 0.0, %v1758
    %v1760 = vpop.f32.mrf.mxu0
    %1761 = vmatprep.mubr.f32.mxu0 0.0
    %1762 = vmatmul.mubr.f32.gmra.mxu0 %v1580
    %v1763 = vpop.f32.mrf.mxu0
    %v1764 = vadd.f32 0.0, %v1763
    %v1765 = vpop.f32.mrf.mxu0
    %1766 = vmatprep.mubr.f32.mxu0 0.0
    %1767 = vmatmul.mubr.f32.gmra.mxu0 %v1583
    %v1768 = vpop.f32.mrf.mxu0
    %v1769 = vadd.f32 0.0, %v1768
    %v1770 = vpop.f32.mrf.mxu0
    %1771 = vmatprep.mubr.f32.mxu0 0.0
    %1772 = vmatmul.mubr.f32.gmra.mxu0 %v1586
    %v1773 = vpop.f32.mrf.mxu0
    %v1774 = vadd.f32 0.0, %v1773
    %v1775 = vpop.f32.mrf.mxu0
    %1776 = vmatprep.mubr.f32.mxu0 0.0
    %1777 = vmatmul.mubr.f32.gmra.mxu0 %v1589
    %v1778 = vpop.f32.mrf.mxu0
    %v1779 = vadd.f32 0.0, %v1778
    %v1780 = vpop.f32.mrf.mxu0
    %1781 = vmatprep.mubr.f32.mxu0 0.0
    %1782 = vmatmul.mubr.f32.gmra.mxu0 %v1592
    %v1783 = vpop.f32.mrf.mxu0
    %v1784 = vadd.f32 0.0, %v1783
    %v1785 = vpop.f32.mrf.mxu0
    %1786 = vmatprep.mubr.f32.mxu0 0.0
    %1787 = vmatmul.mubr.f32.gmra.mxu0 %v1595
    %v1788 = vpop.f32.mrf.mxu0
    %v1789 = vadd.f32 0.0, %v1788
    %v1790 = vpop.f32.mrf.mxu0
    %1791 = vmatprep.mubr.f32.mxu0 0.0
    %1792 = vmatmul.mubr.f32.gmra.mxu0 %v1598
    %v1793 = vpop.f32.mrf.mxu0
    %v1794 = vadd.f32 0.0, %v1793
    %v1795 = vpop.f32.mrf.mxu0
    %1796 = vmatprep.mubr.f32.mxu0 0.0
    %1797 = vmatmul.mubr.f32.gmra.mxu0 %v1601
    %v1798 = vpop.f32.mrf.mxu0
    %v1799 = vadd.f32 0.0, %v1798
    %v1800 = vpop.f32.mrf.mxu0
    %1801 = vmatprep.mubr.f32.mxu0 0.0
    %1802 = vmatmul.mubr.f32.gmra.mxu0 %v1604
    %v1803 = vpop.f32.mrf.mxu0
    %v1804 = vadd.f32 0.0, %v1803
    %v1805 = vpop.f32.mrf.mxu0
    %1806 = vmatprep.mubr.f32.mxu0 0.0
    %1807 = vmatmul.mubr.f32.gmra.mxu0 %v1607
    %v1808 = vpop.f32.mrf.mxu0
    %v1809 = vadd.f32 0.0, %v1808
    %v1810 = vpop.f32.mrf.mxu0
    %1811 = vmatprep.mubr.f32.mxu0 0.0
    %1812 = vmatmul.mubr.f32.gmra.mxu0 %v1610
    %v1813 = vpop.f32.mrf.mxu0
    %v1814 = vadd.f32 0.0, %v1813
    %v1815 = vpop.f32.mrf.mxu0
    %1816 = vmatprep.mubr.f32.mxu0 0.0
    %1817 = vmatmul.mubr.f32.gmra.mxu0 %v1613
    %v1818 = vpop.f32.mrf.mxu0
    %v1819 = vadd.f32 0.0, %v1818
    %v1820 = vpop.f32.mrf.mxu0
    %1821 = vmatprep.mubr.f32.mxu0 0.0
    %1822 = vmatmul.mubr.f32.gmra.mxu0 %v1616
    %v1823 = vpop.f32.mrf.mxu0
    %v1824 = vadd.f32 0.0, %v1823
    %v1825 = vpop.f32.mrf.mxu0
    %1826 = vmatprep.mubr.f32.mxu0 0.0
    %1827 = vmatmul.mubr.f32.gmra.mxu0 %v1619
    %v1828 = vpop.f32.mrf.mxu0
    %v1829 = vadd.f32 0.0, %v1828
    %v1830 = vpop.f32.mrf.mxu0
    %1831 = vmatprep.mubr.f32.mxu0 0.0
    %1832 = vmatmul.mubr.f32.gmra.mxu0 %v1622
    %v1833 = vpop.f32.mrf.mxu0
    %v1834 = vadd.f32 0.0, %v1833
    %v1835 = vpop.f32.mrf.mxu0
    %1836 = vmatprep.mubr.f32.mxu0 0.0
    %1837 = vmatmul.mubr.f32.gmra.mxu0 %v1625
    %v1838 = vpop.f32.mrf.mxu0
    %v1839 = vadd.f32 0.0, %v1838
    %v1840 = vpop.f32.mrf.mxu0
    %1841 = vmatprep.mubr.f32.mxu0 0.0
    %1842 = vmatmul.mubr.f32.gmra.mxu0 %v1628
    %v1843 = vpop.f32.mrf.mxu0
    %v1844 = vadd.f32 0.0, %v1843
    %v1845 = vpop.f32.mrf.mxu0
    %1846 = vmatprep.mubr.f32.mxu0 0.0
    %1847 = vmatmul.mubr.f32.gmra.mxu0 %v1631
    %v1848 = vpop.f32.mrf.mxu0
    %v1849 = vadd.f32 0.0, %v1848
    %v1850 = vpop.f32.mrf.mxu0
    %1851 = vmatprep.mubr.f32.mxu0 0.0
    %1852 = vmatmul.mubr.f32.gmra.mxu0 %v1634
    %v1853 = vpop.f32.mrf.mxu0
    %v1854 = vadd.f32 0.0, %v1853
    %v1855 = vpop.f32.mrf.mxu0
    %1856 = vmatprep.mubr.f32.mxu0 0.0
    %1857 = vmatmul.mubr.f32.gmra.mxu0 %v1637
    %v1858 = vpop.f32.mrf.mxu0
    %v1859 = vadd.f32 0.0, %v1858
    %v1860 = vpop.f32.mrf.mxu0
    %1861 = vmatprep.mubr.f32.mxu0 0.0
    %1862 = vmatmul.mubr.f32.gmra.mxu0 %v1640
    %v1863 = vpop.f32.mrf.mxu0
    %v1864 = vadd.f32 0.0, %v1863
    %v1865 = vpop.f32.mrf.mxu0
    %1866 = vmatprep.mubr.f32.mxu0 0.0
    %1867 = vmatmul.mubr.f32.gmra.mxu0 %v1643
    %v1868 = vpop.f32.mrf.mxu0
    %v1869 = vadd.f32 0.0, %v1868
    %v1870 = vpop.f32.mrf.mxu0
    %1871 = vmatprep.mubr.f32.mxu0 0.0
    %1872 = vmatmul.mubr.f32.gmra.mxu0 %v1646
    %v1873 = vpop.f32.mrf.mxu0
    %v1874 = vadd.f32 0.0, %v1873
    %v1875 = vpop.f32.mrf.mxu0
    %1876 = vdwg.mxu0
    %v1877 = vmul.f32 %v1719, %v687
    %v1878 = vmul.f32 %v1724, %v692
    %v1879 = vmul.f32 %v1729, %v697
    %v1880 = vmul.f32 %v1734, %v702
    %v1881 = vmul.f32 %v1739, %v707
    %v1882 = vmul.f32 %v1744, %v712
    %v1883 = vmul.f32 %v1749, %v717
    %v1884 = vmul.f32 %v1754, %v722
    %v1885 = vmul.f32 %v1759, %v727
    %v1886 = vmul.f32 %v1764, %v732
    %v1887 = vmul.f32 %v1769, %v737
    %v1888 = vmul.f32 %v1774, %v742
    %v1889 = vmul.f32 %v1779, %v747
    %v1890 = vmul.f32 %v1784, %v752
    %v1891 = vmul.f32 %v1789, %v757
    %v1892 = vmul.f32 %v1794, %v762
    %v1893 = vmul.f32 %v1799, %v767
    %v1894 = vmul.f32 %v1804, %v772
    %v1895 = vmul.f32 %v1809, %v777
    %v1896 = vmul.f32 %v1814, %v782
    %v1897 = vmul.f32 %v1819, %v787
    %v1898 = vmul.f32 %v1824, %v792
    %v1899 = vmul.f32 %v1829, %v797
    %v1900 = vmul.f32 %v1834, %v802
    %v1901 = vmul.f32 %v1839, %v807
    %v1902 = vmul.f32 %v1844, %v812
    %v1903 = vmul.f32 %v1849, %v817
    %v1904 = vmul.f32 %v1854, %v822
    %v1905 = vmul.f32 %v1859, %v827
    %v1906 = vmul.f32 %v1864, %v832
    %v1907 = vmul.f32 %v1869, %v837
    %v1908 = vmul.f32 %v1874, %v842
    %v1909 = vadd.f32 %v1877, %v1878
    %v1910 = vrot.slane %v1909, 4
    %v1911 = vadd.f32 %v1909, %v1910
    %v1912 = vrot.slane %v1911, 2
    %v1913 = vadd.f32 %v1911, %v1912
    %v1914 = vrot.slane %v1913, 1
    %v1915 = vadd.f32 %v1913, %v1914
    %v1916 = vadd.f32 %v1879, %v1880
    %v1917 = vrot.slane %v1916, 4
    %v1918 = vadd.f32 %v1916, %v1917
    %v1919 = vrot.slane %v1918, 2
    %v1920 = vadd.f32 %v1918, %v1919
    %v1921 = vrot.slane %v1920, 1
    %v1922 = vadd.f32 %v1920, %v1921
    %v1923 = vadd.f32 %v1881, %v1882
    %v1924 = vrot.slane %v1923, 4
    %v1925 = vadd.f32 %v1923, %v1924
    %v1926 = vrot.slane %v1925, 2
    %v1927 = vadd.f32 %v1925, %v1926
    %v1928 = vrot.slane %v1927, 1
    %v1929 = vadd.f32 %v1927, %v1928
    %v1930 = vadd.f32 %v1883, %v1884
    %v1931 = vrot.slane %v1930, 4
    %v1932 = vadd.f32 %v1930, %v1931
    %v1933 = vrot.slane %v1932, 2
    %v1934 = vadd.f32 %v1932, %v1933
    %v1935 = vrot.slane %v1934, 1
    %v1936 = vadd.f32 %v1934, %v1935
    %v1937 = vadd.f32 %v1885, %v1886
    %v1938 = vrot.slane %v1937, 4
    %v1939 = vadd.f32 %v1937, %v1938
    %v1940 = vrot.slane %v1939, 2
    %v1941 = vadd.f32 %v1939, %v1940
    %v1942 = vrot.slane %v1941, 1
    %v1943 = vadd.f32 %v1941, %v1942
    %v1944 = vadd.f32 %v1887, %v1888
    %v1945 = vrot.slane %v1944, 4
    %v1946 = vadd.f32 %v1944, %v1945
    %v1947 = vrot.slane %v1946, 2
    %v1948 = vadd.f32 %v1946, %v1947
    %v1949 = vrot.slane %v1948, 1
    %v1950 = vadd.f32 %v1948, %v1949
    %v1951 = vadd.f32 %v1889, %v1890
    %v1952 = vrot.slane %v1951, 4
    %v1953 = vadd.f32 %v1951, %v1952
    %v1954 = vrot.slane %v1953, 2
    %v1955 = vadd.f32 %v1953, %v1954
    %v1956 = vrot.slane %v1955, 1
    %v1957 = vadd.f32 %v1955, %v1956
    %v1958 = vadd.f32 %v1891, %v1892
    %v1959 = vrot.slane %v1958, 4
    %v1960 = vadd.f32 %v1958, %v1959
    %v1961 = vrot.slane %v1960, 2
    %v1962 = vadd.f32 %v1960, %v1961
    %v1963 = vrot.slane %v1962, 1
    %v1964 = vadd.f32 %v1962, %v1963
    %v1965 = vadd.f32 %v1893, %v1894
    %v1966 = vrot.slane %v1965, 4
    %v1967 = vadd.f32 %v1965, %v1966
    %v1968 = vrot.slane %v1967, 2
    %v1969 = vadd.f32 %v1967, %v1968
    %v1970 = vrot.slane %v1969, 1
    %v1971 = vadd.f32 %v1969, %v1970
    %v1972 = vadd.f32 %v1895, %v1896
    %v1973 = vrot.slane %v1972, 4
    %v1974 = vadd.f32 %v1972, %v1973
    %v1975 = vrot.slane %v1974, 2
    %v1976 = vadd.f32 %v1974, %v1975
    %v1977 = vrot.slane %v1976, 1
    %v1978 = vadd.f32 %v1976, %v1977
    %v1979 = vadd.f32 %v1897, %v1898
    %v1980 = vrot.slane %v1979, 4
    %v1981 = vadd.f32 %v1979, %v1980
    %v1982 = vrot.slane %v1981, 2
    %v1983 = vadd.f32 %v1981, %v1982
    %v1984 = vrot.slane %v1983, 1
    %v1985 = vadd.f32 %v1983, %v1984
    %v1986 = vadd.f32 %v1899, %v1900
    %v1987 = vrot.slane %v1986, 4
    %v1988 = vadd.f32 %v1986, %v1987
    %v1989 = vrot.slane %v1988, 2
    %v1990 = vadd.f32 %v1988, %v1989
    %v1991 = vrot.slane %v1990, 1
    %v1992 = vadd.f32 %v1990, %v1991
    %v1993 = vadd.f32 %v1901, %v1902
    %v1994 = vrot.slane %v1993, 4
    %v1995 = vadd.f32 %v1993, %v1994
    %v1996 = vrot.slane %v1995, 2
    %v1997 = vadd.f32 %v1995, %v1996
    %v1998 = vrot.slane %v1997, 1
    %v1999 = vadd.f32 %v1997, %v1998
    %v2000 = vadd.f32 %v1903, %v1904
    %v2001 = vrot.slane %v2000, 4
    %v2002 = vadd.f32 %v2000, %v2001
    %v2003 = vrot.slane %v2002, 2
    %v2004 = vadd.f32 %v2002, %v2003
    %v2005 = vrot.slane %v2004, 1
    %v2006 = vadd.f32 %v2004, %v2005
    %v2007 = vadd.f32 %v1905, %v1906
    %v2008 = vrot.slane %v2007, 4
    %v2009 = vadd.f32 %v2007, %v2008
    %v2010 = vrot.slane %v2009, 2
    %v2011 = vadd.f32 %v2009, %v2010
    %v2012 = vrot.slane %v2011, 1
    %v2013 = vadd.f32 %v2011, %v2012
    %v2014 = vadd.f32 %v1907, %v1908
    %v2015 = vrot.slane %v2014, 4
    %v2016 = vadd.f32 %v2014, %v2015
    %v2017 = vrot.slane %v2016, 2
    %v2018 = vadd.f32 %v2016, %v2017
    %v2019 = vrot.slane %v2018, 1
    %v2020 = vadd.f32 %v2018, %v2019
    %vm2037 = vcmask 1041409
    %v2038 = vsel %vm2037, %v1922, %v1915
    %vm2039 = vcmask 1042434
    %v2040 = vsel %vm2039, %v1929, %v2038
    %vm2041 = vcmask 1043459
    %v2042 = vsel %vm2041, %v1936, %v2040
    %vm2043 = vcmask 1044484
    %v2044 = vsel %vm2043, %v1943, %v2042
    %vm2045 = vcmask 1045509
    %v2046 = vsel %vm2045, %v1950, %v2044
    %vm2047 = vcmask 1046534
    %v2048 = vsel %vm2047, %v1957, %v2046
    %vm2049 = vcmask 1047559
    %v2050 = vsel %vm2049, %v1964, %v2048
    %v2051 = vsel %vm2037, %v1978, %v1971
    %v2052 = vsel %vm2039, %v1985, %v2051
    %v2053 = vsel %vm2041, %v1992, %v2052
    %v2054 = vsel %vm2043, %v1999, %v2053
    %v2055 = vsel %vm2045, %v2006, %v2054
    %v2056 = vsel %vm2047, %v2013, %v2055
    %v2057 = vsel %vm2049, %v2020, %v2056
    %2060 = vst [vmem:[#allocation7] sm:$0xff] %v2050
    %2061 = vst [vmem:[#allocation7 + $0x8] sm:$0xff] %v2057
    // Predicated region
    $region38: #{tpu_custom_call.1} parent=1 // pred_check
      _
    $region39: #{tpu_custom_call.1} parent=1 // pred_check_branch
      %2063 = sbr.rel (0) target = $region41
    $region40: #{tpu_custom_call.1} parent=1 // pred_region
      %s2065 = ssub.s32 256, 256
      %2066 = vsyncadd [#allocation4], %s2065
      %s2067 = sshll.u32 [#allocation7], 4
      %s2068 = int_to_ptr.vmem [resolvable:$true] %s2067
      %2073 = dma.vmem_to_hbm [thread:$0]  %s2068, 256, %s7, [#allocation4], 128, 128, 8
    $region41: #{tpu_custom_call.1} parent=1 // pred_fallthru
      _
    // Predicated region
    $region42: #{tpu_custom_call.1} parent=1 // pred_check
      _
    $region43: #{tpu_custom_call.1} parent=1 // pred_check_branch
      %2075 = sbr.rel (0) target = $region45
    $region44: #{tpu_custom_call.1} parent=1 // pred_region
      %2076 = dma.done [#allocation4], 256
    $region45: #{tpu_custom_call.1} parent=1 // pred_fallthru
      _
    %2077 = vsyncpa [#allocation3], 1
    %2078 = vsyncpa [#allocation6], 1
    %2079 = vsyncpa [#allocation4], 1

</llo_original>
